<compile_context>
chip_gen: v7x
topology: tpu7x:2x2x1
jax: 0.10.0
libtpu: 0.0.40
codegen_flags: <defaults>
</compile_context>

<pallas_src>
import functools

import jax
import jax.numpy as jnp
from jax import lax
from jax.experimental import pallas as pl
from jax.experimental.pallas import tpu as pltpu

# ---- module constants (from the PyTorch script) --------------------------------------
n_azimuth = 16
n_color = 3
n_sublevel = n_eccentricity = 4
n_levels = 7
n_phase = 1
n_theta = 8

# ---- derived static sizes of the folded per-element problem --------------------------
_CIN = n_color * n_theta * n_phase                 # 24
_H, _W = n_levels * (n_eccentricity // 2), n_azimuth   # 14, 16
_HO1, _WO1 = 7, 8                                  # conv1 output (3x3, stride 2, pad 1)
_HO2, _WO2 = 4, 4                                  # conv2 output
_K1 = 9 * _CIN                                     # 216
_C1PAD = 128                                       # conv1 out channels padded 64 -> 128
_K2 = 9 * _C1PAD                                   # 1152
_COUT = 128

# yph scratch layout: yph[pr, pc, i, j, :] = y1_pad[2*i + pr, 2*j + pc, :]
# where y1_pad is the conv1 output zero-padded by 1 (9 x 10 spatial).
# conv2 tap (kh, kw) then reads the CONTIGUOUS window
#   yph[kh%2, kw%2, kh//2 : kh//2+4, kw//2 : kw//2+4, :].
# The conv1 im2col rows are pre-ordered in the wrapper as four phase blocks
# (odd/even output row x odd/even output col) so that scattering y1 into yph is a
# handful of contiguous (4, 128) stores:   (row0, n_rows, pr, pc, i0, j0)
_Y1_BLOCKS = (
    (0,  3, 0, 0, 1, 1),   # odd rows  x odd cols   (3x4)
    (12, 3, 0, 1, 1, 0),   # odd rows  x even cols  (3x4)
    (24, 4, 1, 0, 0, 1),   # even rows x odd cols   (4x4)
    (40, 4, 1, 1, 0, 0),   # even rows x even cols  (4x4)
)


# ---- fused kernel: conv1 + conv2 for one (half, batch) element ------------------------
def _stn_fused_kernel(lhs1_ref, w1_ref, w2_ref, o_ref, yph_ref, lhs2_ref, *, relu):
    # conv1: single big-K matmul on the pre-built im2col patches  -> (56, 128) fp32
    y1 = jnp.dot(lhs1_ref[0], w1_ref[...], preferred_element_type=jnp.float32)
    if relu:
        y1 = jnp.maximum(y1, 0.0)

    # scatter conv1 output into the zero-padded, phase-decomposed scratch
    yph_ref[...] = jnp.zeros_like(yph_ref)           # border / unused phases must be 0
    for row0, n_rows, pr, pc, i0, j0 in _Y1_BLOCKS:
        for ir in range(n_rows):
            r = row0 + 4 * ir
            yph_ref[pr, pc, i0 + ir, j0:j0 + 4, :] = y1[r:r + 4, :]

    # conv2: assemble the (16, 1152) im2col LHS (all 128-lane aligned copies) ...
    for kh in range(3):
        pr, i0 = kh % 2, kh // 2
        for kw in range(3):
            pc, j0 = kw % 2, kw // 2
            lane0 = (3 * kh + kw) * _C1PAD
            for t in range(_HO2):
                lhs2_ref[4 * t:4 * t + 4, lane0:lane0 + _C1PAD] = (
                    yph_ref[pr, pc, i0 + t, j0:j0 + 4, :])
    # ... and do one (16, 1152) x (1152, 128) matmul
    y2 = jnp.dot(lhs2_ref[...], w2_ref[...], preferred_element_type=jnp.float32)
    if relu:
        y2 = jnp.maximum(y2, 0.0)
    o_ref[0] = y2.astype(o_ref.dtype)


# ---- wrapper-side prep (done once over the folded 2B batch) ----------------------------
def _build_conv1_im2col(imgs):
    """(N, 14, 16, 24) NHWC -> (N, 56, 216) stride-2 3x3 patches, phase-block row order."""
    n = imgs.shape[0]
    xp = jnp.pad(imgs, ((0, 0), (1, 1), (1, 1), (0, 0)))            # (N, 16, 18, 24)
    taps = [xp[:, kh:kh + 2 * _HO1:2, kw:kw + 2 * _WO1:2, :]        # (N, 7, 8, 24)
            for kh in range(3) for kw in range(3)]
    patches = jnp.concatenate(taps, axis=-1)                        # (N, 7, 8, 216)
    blocks = (patches[:, 1::2, 1::2], patches[:, 1::2, 0::2],
              patches[:, 0::2, 1::2], patches[:, 0::2, 0::2])
    return jnp.concatenate([b.reshape(n, -1, _K1) for b in blocks], axis=1)   # (N, 56, 216)


def stn_encoder_forward(x, w1_oihw, w2_oihw, relu=False):
    """x: (B, n_levels, n_color, n_eccentricity, n_azimuth, n_theta, n_phase) float32."""
    B = x.shape[0]
    nE = x.shape[3]

    # torch: x[:, :, :, :2] / [:, :, :, 2:]; permute(0,2,5,6,1,3,4); view(B, 24, 14, 16)
    halves = []
    for xs in (x[:, :, :, : nE // 2], x[:, :, :, nE // 2:]):
        xp = jnp.transpose(xs, (0, 2, 5, 6, 1, 3, 4)).reshape(B, _CIN, _H, _W)  # NCHW
        halves.append(jnp.transpose(xp, (0, 2, 3, 1)))                          # NHWC
    imgs = jnp.concatenate(halves, axis=0)                                      # (2B,14,16,24)

    lhs1 = _build_conv1_im2col(imgs)                                            # (2B, 56, 216)
    w1mat = jnp.pad(jnp.transpose(w1_oihw, (2, 3, 1, 0)).reshape(_K1, 64),
                    ((0, 0), (0, _C1PAD - 64)))                                 # (216, 128)
    w2mat = jnp.pad(jnp.transpose(w2_oihw, (2, 3, 1, 0)),
                    ((0, 0), (0, 0), (0, _C1PAD - 64), (0, 0))).reshape(_K2, _COUT)  # (1152,128)

    kernel = functools.partial(_stn_fused_kernel, relu=relu)
    y2 = pl.pallas_call(
        kernel,
        out_shape=jax.ShapeDtypeStruct((2 * B, _HO2 * _WO2, _COUT), x.dtype),
        grid=(2 * B,),
        in_specs=[
            pl.BlockSpec((1, _HO1 * _WO1, _K1), lambda n: (n, 0, 0)),   # im2col patches
            pl.BlockSpec((_K1, _C1PAD), lambda n: (0, 0)),              # conv1 weights (resident)
            pl.BlockSpec((_K2, _COUT), lambda n: (0, 0)),               # conv2 weights (resident)
        ],
        out_specs=pl.BlockSpec((1, _HO2 * _WO2, _COUT), lambda n: (n, 0, 0)),
        scratch_shapes=[
            pltpu.VMEM((2, 2, 5, 5, _C1PAD), jnp.float32),   # phase-decomposed padded y1
            pltpu.VMEM((_HO2 * _WO2, _K2), jnp.float32),     # conv2 im2col LHS
        ],
        compiler_params=pltpu.CompilerParams(dimension_semantics=("parallel",)),
    )(lhs1, w1mat, w2mat)

    # (2B, 16, 128) -> (B, 256, 4, 4) NCHW; channels = [int half (0:128) | ext half (128:256)]
    y2 = y2.reshape(2, B, _HO2, _WO2, _COUT)
    return jnp.transpose(y2, (1, 0, 4, 2, 3)).reshape(B, 2 * _COUT, _HO2, _WO2)


# ---- pure-JAX reference (correctness check only) ---------------------------------------
def ref_forward(x, w1_oihw, w2_oihw, relu=False):
    B = x.shape[0]
    nL, nC, nE, nA, nT, nP = x.shape[1:]
    conv = lambda inp, w: lax.conv_general_dilated(
        inp, w, window_strides=(2, 2), padding=((1, 1), (1, 1)),
        dimension_numbers=("NCHW", "OIHW", "NCHW"))
    outs = []
    for xs in (x[:, :, :, : nE // 2], x[:, :, :, nE // 2:]):
        xp = jnp.transpose(xs, (0, 2, 5, 6, 1, 3, 4)).reshape(
            B, nC * nT * nP, nL * (nE // 2), nA)
        y = conv(xp, w1_oihw)
        if relu:
            y = jnp.maximum(y, 0.0)
        y = conv(y, w2_oihw)
        if relu:
            y = jnp.maximum(y, 0.0)
        outs.append(y)
    return jnp.concatenate(outs, axis=1)


if __name__ == "__main__":
    key = jax.random.PRNGKey(0)
    kx, kw1, kw2 = jax.random.split(key, 3)

    B = 2
    x = jax.random.normal(
        kx, (B, n_levels, n_color, n_eccentricity, n_azimuth, n_theta, n_phase),
        dtype=jnp.float32)

    # deterministic synthetic parameters (PyTorch OIHW shapes from __init__)
    c_in1 = n_color * n_phase * n_theta                # 24
    w1_oihw = 0.05 * jax.random.normal(kw1, (64, c_in1, 3, 3), dtype=jnp.float32)
    w2_oihw = 0.05 * jax.random.normal(kw2, (128, 64, 3, 3), dtype=jnp.float32)

    fwd = jax.jit(stn_encoder_forward, static_argnames=("relu",))

    out = jax.block_until_ready(fwd(x, w1_oihw, w2_oihw, relu=False))
    assert out.shape == (B, 256, 4, 4), out.shape
    ref = jax.block_until_ready(ref_forward(x, w1_oihw, w2_oihw, relu=False))
    assert float(jnp.max(jnp.abs(out - ref))) < 2e-3

    out_r = jax.block_until_ready(fwd(x, w1_oihw, w2_oihw, relu=True))
    ref_r = jax.block_until_ready(ref_forward(x, w1_oihw, w2_oihw, relu=True))
    assert float(jnp.max(jnp.abs(out_r - ref_r))) < 2e-3

    print("KERNEL_OK")
</pallas_src>

<mosaic_0001>
module attributes {stable_mosaic.version = 11 : i64} {
  func.func @_stn_fused_kernel(%arg0: i32, %arg1: memref<1x56x216xf32, #tpu.memory_space<vmem>>, %arg2: memref<216x128xf32, #tpu.memory_space<vmem>>, %arg3: memref<1152x128xf32, #tpu.memory_space<vmem>>, %arg4: memref<1x16x128xf32, #tpu.memory_space<vmem>>, %arg5: memref<2x2x5x5x128xf32, #tpu.memory_space<vmem>>, %arg6: memref<16x1152xf32, #tpu.memory_space<vmem>>) attributes {dimension_semantics = [#tpu.dimension_semantics<parallel>], iteration_bounds = array<i64: 4>, scalar_prefetch = 0 : i64, scratch_operands = 2 : i64, tpu.core_type = #tpu.core_type<tc>, window_params = [{transform_indices = @transform_0, window_bounds = array<i64: 1, 56, 216>}, {pipeline_mode = #tpu.pipeline_mode<synchronous>, transform_indices = @transform_1, window_bounds = array<i64: 216, 128>}, {pipeline_mode = #tpu.pipeline_mode<synchronous>, transform_indices = @transform_2, window_bounds = array<i64: 1152, 128>}, {transform_indices = @transform_3, window_bounds = array<i64: 1, 16, 128>}]} {
    %c0 = arith.constant 0 : index
    %c0_0 = arith.constant 0 : index
    %c0_1 = arith.constant 0 : index
    %0 = vector.load %arg1[%c0, %c0_0, %c0_1] : memref<1x56x216xf32, #tpu.memory_space<vmem>>, vector<1x56x216xf32>
    %1 = vector.shape_cast %0 : vector<1x56x216xf32> to vector<56x216xf32>
    %c0_2 = arith.constant 0 : index
    %c0_3 = arith.constant 0 : index
    %2 = vector.load %arg2[%c0_2, %c0_3] : memref<216x128xf32, #tpu.memory_space<vmem>>, vector<216x128xf32>
    %cst = arith.constant dense<0.000000e+00> : vector<56x128xf32>
    %3 = tpu.matmul %1, %2, %cst {dimension_numbers = #tpu.dot_dimension_numbers<[1], [0], [0], [1], [0, 0, 1, 1], [], []>} : vector<56x216xf32>, vector<216x128xf32>, vector<56x128xf32> -> vector<56x128xf32>
    %cst_4 = arith.constant 0.000000e+00 : f32
    %4 = vector.broadcast %cst_4 : f32 to vector<2x2x5x5x128xf32>
    %c0_5 = arith.constant 0 : index
    %c0_6 = arith.constant 0 : index
    %c0_7 = arith.constant 0 : index
    %c0_8 = arith.constant 0 : index
    %c0_9 = arith.constant 0 : index
    %5 = vector.load %arg5[%c0_5, %c0_6, %c0_7, %c0_8, %c0_9] : memref<2x2x5x5x128xf32, #tpu.memory_space<vmem>>, vector<2x2x5x5x128xf32>
    tpu.vector_store %arg5[%c0_5, %c0_6, %c0_7, %c0_8, %c0_9], %4 {strides = array<i32>} : memref<2x2x5x5x128xf32, #tpu.memory_space<vmem>>, vector<2x2x5x5x128xf32>,
    %6 = vector.extract_strided_slice %3 {offsets = [0, 0], sizes = [4, 128], strides = [1, 1]} : vector<56x128xf32> to vector<4x128xf32>
    %c0_10 = arith.constant 0 : index
    %c0_11 = arith.constant 0 : index
    %c1 = arith.constant 1 : index
    %c1_12 = arith.constant 1 : index
    %c0_13 = arith.constant 0 : index
    %7 = vector.load %arg5[%c0_10, %c0_11, %c1, %c1_12, %c0_13] : memref<2x2x5x5x128xf32, #tpu.memory_space<vmem>>, vector<1x1x1x4x128xf32>
    %8 = vector.shape_cast %7 : vector<1x1x1x4x128xf32> to vector<4x128xf32>
    %9 = vector.shape_cast %6 : vector<4x128xf32> to vector<1x1x1x4x128xf32>
    tpu.vector_store %arg5[%c0_10, %c0_11, %c1, %c1_12, %c0_13], %9 {strides = array<i32>} : memref<2x2x5x5x128xf32, #tpu.memory_space<vmem>>, vector<1x1x1x4x128xf32>,
    %10 = vector.extract_strided_slice %3 {offsets = [4, 0], sizes = [4, 128], strides = [1, 1]} : vector<56x128xf32> to vector<4x128xf32>
    %c0_14 = arith.constant 0 : index
    %c0_15 = arith.constant 0 : index
    %c2 = arith.constant 2 : index
    %c1_16 = arith.constant 1 : index
    %c0_17 = arith.constant 0 : index
    %11 = vector.load %arg5[%c0_14, %c0_15, %c2, %c1_16, %c0_17] : memref<2x2x5x5x128xf32, #tpu.memory_space<vmem>>, vector<1x1x1x4x128xf32>
    %12 = vector.shape_cast %11 : vector<1x1x1x4x128xf32> to vector<4x128xf32>
    %13 = vector.shape_cast %10 : vector<4x128xf32> to vector<1x1x1x4x128xf32>
    tpu.vector_store %arg5[%c0_14, %c0_15, %c2, %c1_16, %c0_17], %13 {strides = array<i32>} : memref<2x2x5x5x128xf32, #tpu.memory_space<vmem>>, vector<1x1x1x4x128xf32>,
    %14 = vector.extract_strided_slice %3 {offsets = [8, 0], sizes = [4, 128], strides = [1, 1]} : vector<56x128xf32> to vector<4x128xf32>
    %c0_18 = arith.constant 0 : index
    %c0_19 = arith.constant 0 : index
    %c3 = arith.constant 3 : index
    %c1_20 = arith.constant 1 : index
    %c0_21 = arith.constant 0 : index
    %15 = vector.load %arg5[%c0_18, %c0_19, %c3, %c1_20, %c0_21] : memref<2x2x5x5x128xf32, #tpu.memory_space<vmem>>, vector<1x1x1x4x128xf32>
    %16 = vector.shape_cast %15 : vector<1x1x1x4x128xf32> to vector<4x128xf32>
    %17 = vector.shape_cast %14 : vector<4x128xf32> to vector<1x1x1x4x128xf32>
    tpu.vector_store %arg5[%c0_18, %c0_19, %c3, %c1_20, %c0_21], %17 {strides = array<i32>} : memref<2x2x5x5x128xf32, #tpu.memory_space<vmem>>, vector<1x1x1x4x128xf32>,
    %18 = vector.extract_strided_slice %3 {offsets = [12, 0], sizes = [4, 128], strides = [1, 1]} : vector<56x128xf32> to vector<4x128xf32>
    %c0_22 = arith.constant 0 : index
    %c1_23 = arith.constant 1 : index
    %c1_24 = arith.constant 1 : index
    %c0_25 = arith.constant 0 : index
    %c0_26 = arith.constant 0 : index
    %19 = vector.load %arg5[%c0_22, %c1_23, %c1_24, %c0_25, %c0_26] : memref<2x2x5x5x128xf32, #tpu.memory_space<vmem>>, vector<1x1x1x4x128xf32>
    %20 = vector.shape_cast %19 : vector<1x1x1x4x128xf32> to vector<4x128xf32>
    %21 = vector.shape_cast %18 : vector<4x128xf32> to vector<1x1x1x4x128xf32>
    tpu.vector_store %arg5[%c0_22, %c1_23, %c1_24, %c0_25, %c0_26], %21 {strides = array<i32>} : memref<2x2x5x5x128xf32, #tpu.memory_space<vmem>>, vector<1x1x1x4x128xf32>,
    %22 = vector.extract_strided_slice %3 {offsets = [16, 0], sizes = [4, 128], strides = [1, 1]} : vector<56x128xf32> to vector<4x128xf32>
    %c0_27 = arith.constant 0 : index
    %c1_28 = arith.constant 1 : index
    %c2_29 = arith.constant 2 : index
    %c0_30 = arith.constant 0 : index
    %c0_31 = arith.constant 0 : index
    %23 = vector.load %arg5[%c0_27, %c1_28, %c2_29, %c0_30, %c0_31] : memref<2x2x5x5x128xf32, #tpu.memory_space<vmem>>, vector<1x1x1x4x128xf32>
    %24 = vector.shape_cast %23 : vector<1x1x1x4x128xf32> to vector<4x128xf32>
    %25 = vector.shape_cast %22 : vector<4x128xf32> to vector<1x1x1x4x128xf32>
    tpu.vector_store %arg5[%c0_27, %c1_28, %c2_29, %c0_30, %c0_31], %25 {strides = array<i32>} : memref<2x2x5x5x128xf32, #tpu.memory_space<vmem>>, vector<1x1x1x4x128xf32>,
    %26 = vector.extract_strided_slice %3 {offsets = [20, 0], sizes = [4, 128], strides = [1, 1]} : vector<56x128xf32> to vector<4x128xf32>
    %c0_32 = arith.constant 0 : index
    %c1_33 = arith.constant 1 : index
    %c3_34 = arith.constant 3 : index
    %c0_35 = arith.constant 0 : index
    %c0_36 = arith.constant 0 : index
    %27 = vector.load %arg5[%c0_32, %c1_33, %c3_34, %c0_35, %c0_36] : memref<2x2x5x5x128xf32, #tpu.memory_space<vmem>>, vector<1x1x1x4x128xf32>
    %28 = vector.shape_cast %27 : vector<1x1x1x4x128xf32> to vector<4x128xf32>
    %29 = vector.shape_cast %26 : vector<4x128xf32> to vector<1x1x1x4x128xf32>
    tpu.vector_store %arg5[%c0_32, %c1_33, %c3_34, %c0_35, %c0_36], %29 {strides = array<i32>} : memref<2x2x5x5x128xf32, #tpu.memory_space<vmem>>, vector<1x1x1x4x128xf32>,
    %30 = vector.extract_strided_slice %3 {offsets = [24, 0], sizes = [4, 128], strides = [1, 1]} : vector<56x128xf32> to vector<4x128xf32>
    %c1_37 = arith.constant 1 : index
    %c0_38 = arith.constant 0 : index
    %c0_39 = arith.constant 0 : index
    %c1_40 = arith.constant 1 : index
    %c0_41 = arith.constant 0 : index
    %31 = vector.load %arg5[%c1_37, %c0_38, %c0_39, %c1_40, %c0_41] : memref<2x2x5x5x128xf32, #tpu.memory_space<vmem>>, vector<1x1x1x4x128xf32>
    %32 = vector.shape_cast %31 : vector<1x1x1x4x128xf32> to vector<4x128xf32>
    %33 = vector.shape_cast %30 : vector<4x128xf32> to vector<1x1x1x4x128xf32>
    tpu.vector_store %arg5[%c1_37, %c0_38, %c0_39, %c1_40, %c0_41], %33 {strides = array<i32>} : memref<2x2x5x5x128xf32, #tpu.memory_space<vmem>>, vector<1x1x1x4x128xf32>,
    %34 = vector.extract_strided_slice %3 {offsets = [28, 0], sizes = [4, 128], strides = [1, 1]} : vector<56x128xf32> to vector<4x128xf32>
    %c1_42 = arith.constant 1 : index
    %c0_43 = arith.constant 0 : index
    %c1_44 = arith.constant 1 : index
    %c1_45 = arith.constant 1 : index
    %c0_46 = arith.constant 0 : index
    %35 = vector.load %arg5[%c1_42, %c0_43, %c1_44, %c1_45, %c0_46] : memref<2x2x5x5x128xf32, #tpu.memory_space<vmem>>, vector<1x1x1x4x128xf32>
    %36 = vector.shape_cast %35 : vector<1x1x1x4x128xf32> to vector<4x128xf32>
    %37 = vector.shape_cast %34 : vector<4x128xf32> to vector<1x1x1x4x128xf32>
    tpu.vector_store %arg5[%c1_42, %c0_43, %c1_44, %c1_45, %c0_46], %37 {strides = array<i32>} : memref<2x2x5x5x128xf32, #tpu.memory_space<vmem>>, vector<1x1x1x4x128xf32>,
    %38 = vector.extract_strided_slice %3 {offsets = [32, 0], sizes = [4, 128], strides = [1, 1]} : vector<56x128xf32> to vector<4x128xf32>
    %c1_47 = arith.constant 1 : index
    %c0_48 = arith.constant 0 : index
    %c2_49 = arith.constant 2 : index
    %c1_50 = arith.constant 1 : index
    %c0_51 = arith.constant 0 : index
    %39 = vector.load %arg5[%c1_47, %c0_48, %c2_49, %c1_50, %c0_51] : memref<2x2x5x5x128xf32, #tpu.memory_space<vmem>>, vector<1x1x1x4x128xf32>
    %40 = vector.shape_cast %39 : vector<1x1x1x4x128xf32> to vector<4x128xf32>
    %41 = vector.shape_cast %38 : vector<4x128xf32> to vector<1x1x1x4x128xf32>
    tpu.vector_store %arg5[%c1_47, %c0_48, %c2_49, %c1_50, %c0_51], %41 {strides = array<i32>} : memref<2x2x5x5x128xf32, #tpu.memory_space<vmem>>, vector<1x1x1x4x128xf32>,
    %42 = vector.extract_strided_slice %3 {offsets = [36, 0], sizes = [4, 128], strides = [1, 1]} : vector<56x128xf32> to vector<4x128xf32>
    %c1_52 = arith.constant 1 : index
    %c0_53 = arith.constant 0 : index
    %c3_54 = arith.constant 3 : index
    %c1_55 = arith.constant 1 : index
    %c0_56 = arith.constant 0 : index
    %43 = vector.load %arg5[%c1_52, %c0_53, %c3_54, %c1_55, %c0_56] : memref<2x2x5x5x128xf32, #tpu.memory_space<vmem>>, vector<1x1x1x4x128xf32>
    %44 = vector.shape_cast %43 : vector<1x1x1x4x128xf32> to vector<4x128xf32>
    %45 = vector.shape_cast %42 : vector<4x128xf32> to vector<1x1x1x4x128xf32>
    tpu.vector_store %arg5[%c1_52, %c0_53, %c3_54, %c1_55, %c0_56], %45 {strides = array<i32>} : memref<2x2x5x5x128xf32, #tpu.memory_space<vmem>>, vector<1x1x1x4x128xf32>,
    %46 = vector.extract_strided_slice %3 {offsets = [40, 0], sizes = [4, 128], strides = [1, 1]} : vector<56x128xf32> to vector<4x128xf32>
    %c1_57 = arith.constant 1 : index
    %c1_58 = arith.constant 1 : index
    %c0_59 = arith.constant 0 : index
    %c0_60 = arith.constant 0 : index
    %c0_61 = arith.constant 0 : index
    %47 = vector.load %arg5[%c1_57, %c1_58, %c0_59, %c0_60, %c0_61] : memref<2x2x5x5x128xf32, #tpu.memory_space<vmem>>, vector<1x1x1x4x128xf32>
    %48 = vector.shape_cast %47 : vector<1x1x1x4x128xf32> to vector<4x128xf32>
    %49 = vector.shape_cast %46 : vector<4x128xf32> to vector<1x1x1x4x128xf32>
    tpu.vector_store %arg5[%c1_57, %c1_58, %c0_59, %c0_60, %c0_61], %49 {strides = array<i32>} : memref<2x2x5x5x128xf32, #tpu.memory_space<vmem>>, vector<1x1x1x4x128xf32>,
    %50 = vector.extract_strided_slice %3 {offsets = [44, 0], sizes = [4, 128], strides = [1, 1]} : vector<56x128xf32> to vector<4x128xf32>
    %c1_62 = arith.constant 1 : index
    %c1_63 = arith.constant 1 : index
    %c1_64 = arith.constant 1 : index
    %c0_65 = arith.constant 0 : index
    %c0_66 = arith.constant 0 : index
    %51 = vector.load %arg5[%c1_62, %c1_63, %c1_64, %c0_65, %c0_66] : memref<2x2x5x5x128xf32, #tpu.memory_space<vmem>>, vector<1x1x1x4x128xf32>
    %52 = vector.shape_cast %51 : vector<1x1x1x4x128xf32> to vector<4x128xf32>
    %53 = vector.shape_cast %50 : vector<4x128xf32> to vector<1x1x1x4x128xf32>
    tpu.vector_store %arg5[%c1_62, %c1_63, %c1_64, %c0_65, %c0_66], %53 {strides = array<i32>} : memref<2x2x5x5x128xf32, #tpu.memory_space<vmem>>, vector<1x1x1x4x128xf32>,
    %54 = vector.extract_strided_slice %3 {offsets = [48, 0], sizes = [4, 128], strides = [1, 1]} : vector<56x128xf32> to vector<4x128xf32>
    %c1_67 = arith.constant 1 : index
    %c1_68 = arith.constant 1 : index
    %c2_69 = arith.constant 2 : index
    %c0_70 = arith.constant 0 : index
    %c0_71 = arith.constant 0 : index
    %55 = vector.load %arg5[%c1_67, %c1_68, %c2_69, %c0_70, %c0_71] : memref<2x2x5x5x128xf32, #tpu.memory_space<vmem>>, vector<1x1x1x4x128xf32>
    %56 = vector.shape_cast %55 : vector<1x1x1x4x128xf32> to vector<4x128xf32>
    %57 = vector.shape_cast %54 : vector<4x128xf32> to vector<1x1x1x4x128xf32>
    tpu.vector_store %arg5[%c1_67, %c1_68, %c2_69, %c0_70, %c0_71], %57 {strides = array<i32>} : memref<2x2x5x5x128xf32, #tpu.memory_space<vmem>>, vector<1x1x1x4x128xf32>,
    %58 = vector.extract_strided_slice %3 {offsets = [52, 0], sizes = [4, 128], strides = [1, 1]} : vector<56x128xf32> to vector<4x128xf32>
    %c1_72 = arith.constant 1 : index
    %c1_73 = arith.constant 1 : index
    %c3_74 = arith.constant 3 : index
    %c0_75 = arith.constant 0 : index
    %c0_76 = arith.constant 0 : index
    %59 = vector.load %arg5[%c1_72, %c1_73, %c3_74, %c0_75, %c0_76] : memref<2x2x5x5x128xf32, #tpu.memory_space<vmem>>, vector<1x1x1x4x128xf32>
    %60 = vector.shape_cast %59 : vector<1x1x1x4x128xf32> to vector<4x128xf32>
    %61 = vector.shape_cast %58 : vector<4x128xf32> to vector<1x1x1x4x128xf32>
    tpu.vector_store %arg5[%c1_72, %c1_73, %c3_74, %c0_75, %c0_76], %61 {strides = array<i32>} : memref<2x2x5x5x128xf32, #tpu.memory_space<vmem>>, vector<1x1x1x4x128xf32>,
    %c0_77 = arith.constant 0 : index
    %c0_78 = arith.constant 0 : index
    %c0_79 = arith.constant 0 : index
    %c0_80 = arith.constant 0 : index
    %c0_81 = arith.constant 0 : index
    %62 = vector.load %arg5[%c0_77, %c0_78, %c0_79, %c0_80, %c0_81] : memref<2x2x5x5x128xf32, #tpu.memory_space<vmem>>, vector<1x1x1x4x128xf32>
    %63 = vector.shape_cast %62 : vector<1x1x1x4x128xf32> to vector<4x128xf32>
    %c0_82 = arith.constant 0 : index
    %c0_83 = arith.constant 0 : index
    %64 = vector.load %arg6[%c0_82, %c0_83] : memref<16x1152xf32, #tpu.memory_space<vmem>>, vector<4x128xf32>
    tpu.vector_store %arg6[%c0_82, %c0_83], %63 {strides = array<i32>} : memref<16x1152xf32, #tpu.memory_space<vmem>>, vector<4x128xf32>,
    %c0_84 = arith.constant 0 : index
    %c0_85 = arith.constant 0 : index
    %c1_86 = arith.constant 1 : index
    %c0_87 = arith.constant 0 : index
    %c0_88 = arith.constant 0 : index
    %65 = vector.load %arg5[%c0_84, %c0_85, %c1_86, %c0_87, %c0_88] : memref<2x2x5x5x128xf32, #tpu.memory_space<vmem>>, vector<1x1x1x4x128xf32>
    %66 = vector.shape_cast %65 : vector<1x1x1x4x128xf32> to vector<4x128xf32>
    %c4 = arith.constant 4 : index
    %c0_89 = arith.constant 0 : index
    %67 = vector.load %arg6[%c4, %c0_89] : memref<16x1152xf32, #tpu.memory_space<vmem>>, vector<4x128xf32>
    tpu.vector_store %arg6[%c4, %c0_89], %66 {strides = array<i32>} : memref<16x1152xf32, #tpu.memory_space<vmem>>, vector<4x128xf32>,
    %c0_90 = arith.constant 0 : index
    %c0_91 = arith.constant 0 : index
    %c2_92 = arith.constant 2 : index
    %c0_93 = arith.constant 0 : index
    %c0_94 = arith.constant 0 : index
    %68 = vector.load %arg5[%c0_90, %c0_91, %c2_92, %c0_93, %c0_94] : memref<2x2x5x5x128xf32, #tpu.memory_space<vmem>>, vector<1x1x1x4x128xf32>
    %69 = vector.shape_cast %68 : vector<1x1x1x4x128xf32> to vector<4x128xf32>
    %c8 = arith.constant 8 : index
    %c0_95 = arith.constant 0 : index
    %70 = vector.load %arg6[%c8, %c0_95] : memref<16x1152xf32, #tpu.memory_space<vmem>>, vector<4x128xf32>
    tpu.vector_store %arg6[%c8, %c0_95], %69 {strides = array<i32>} : memref<16x1152xf32, #tpu.memory_space<vmem>>, vector<4x128xf32>,
    %c0_96 = arith.constant 0 : index
    %c0_97 = arith.constant 0 : index
    %c3_98 = arith.constant 3 : index
    %c0_99 = arith.constant 0 : index
    %c0_100 = arith.constant 0 : index
    %71 = vector.load %arg5[%c0_96, %c0_97, %c3_98, %c0_99, %c0_100] : memref<2x2x5x5x128xf32, #tpu.memory_space<vmem>>, vector<1x1x1x4x128xf32>
    %72 = vector.shape_cast %71 : vector<1x1x1x4x128xf32> to vector<4x128xf32>
    %c12 = arith.constant 12 : index
    %c0_101 = arith.constant 0 : index
    %73 = vector.load %arg6[%c12, %c0_101] : memref<16x1152xf32, #tpu.memory_space<vmem>>, vector<4x128xf32>
    tpu.vector_store %arg6[%c12, %c0_101], %72 {strides = array<i32>} : memref<16x1152xf32, #tpu.memory_space<vmem>>, vector<4x128xf32>,
    %c0_102 = arith.constant 0 : index
    %c1_103 = arith.constant 1 : index
    %c0_104 = arith.constant 0 : index
    %c0_105 = arith.constant 0 : index
    %c0_106 = arith.constant 0 : index
    %74 = vector.load %arg5[%c0_102, %c1_103, %c0_104, %c0_105, %c0_106] : memref<2x2x5x5x128xf32, #tpu.memory_space<vmem>>, vector<1x1x1x4x128xf32>
    %75 = vector.shape_cast %74 : vector<1x1x1x4x128xf32> to vector<4x128xf32>
    %c0_107 = arith.constant 0 : index
    %c128 = arith.constant 128 : index
    %76 = vector.load %arg6[%c0_107, %c128] : memref<16x1152xf32, #tpu.memory_space<vmem>>, vector<4x128xf32>
    tpu.vector_store %arg6[%c0_107, %c128], %75 {strides = array<i32>} : memref<16x1152xf32, #tpu.memory_space<vmem>>, vector<4x128xf32>,
    %c0_108 = arith.constant 0 : index
    %c1_109 = arith.constant 1 : index
    %c1_110 = arith.constant 1 : index
    %c0_111 = arith.constant 0 : index
    %c0_112 = arith.constant 0 : index
    %77 = vector.load %arg5[%c0_108, %c1_109, %c1_110, %c0_111, %c0_112] : memref<2x2x5x5x128xf32, #tpu.memory_space<vmem>>, vector<1x1x1x4x128xf32>
    %78 = vector.shape_cast %77 : vector<1x1x1x4x128xf32> to vector<4x128xf32>
    %c4_113 = arith.constant 4 : index
    %c128_114 = arith.constant 128 : index
    %79 = vector.load %arg6[%c4_113, %c128_114] : memref<16x1152xf32, #tpu.memory_space<vmem>>, vector<4x128xf32>
    tpu.vector_store %arg6[%c4_113, %c128_114], %78 {strides = array<i32>} : memref<16x1152xf32, #tpu.memory_space<vmem>>, vector<4x128xf32>,
    %c0_115 = arith.constant 0 : index
    %c1_116 = arith.constant 1 : index
    %c2_117 = arith.constant 2 : index
    %c0_118 = arith.constant 0 : index
    %c0_119 = arith.constant 0 : index
    %80 = vector.load %arg5[%c0_115, %c1_116, %c2_117, %c0_118, %c0_119] : memref<2x2x5x5x128xf32, #tpu.memory_space<vmem>>, vector<1x1x1x4x128xf32>
    %81 = vector.shape_cast %80 : vector<1x1x1x4x128xf32> to vector<4x128xf32>
    %c8_120 = arith.constant 8 : index
    %c128_121 = arith.constant 128 : index
    %82 = vector.load %arg6[%c8_120, %c128_121] : memref<16x1152xf32, #tpu.memory_space<vmem>>, vector<4x128xf32>
    tpu.vector_store %arg6[%c8_120, %c128_121], %81 {strides = array<i32>} : memref<16x1152xf32, #tpu.memory_space<vmem>>, vector<4x128xf32>,
    %c0_122 = arith.constant 0 : index
    %c1_123 = arith.constant 1 : index
    %c3_124 = arith.constant 3 : index
    %c0_125 = arith.constant 0 : index
    %c0_126 = arith.constant 0 : index
    %83 = vector.load %arg5[%c0_122, %c1_123, %c3_124, %c0_125, %c0_126] : memref<2x2x5x5x128xf32, #tpu.memory_space<vmem>>, vector<1x1x1x4x128xf32>
    %84 = vector.shape_cast %83 : vector<1x1x1x4x128xf32> to vector<4x128xf32>
    %c12_127 = arith.constant 12 : index
    %c128_128 = arith.constant 128 : index
    %85 = vector.load %arg6[%c12_127, %c128_128] : memref<16x1152xf32, #tpu.memory_space<vmem>>, vector<4x128xf32>
    tpu.vector_store %arg6[%c12_127, %c128_128], %84 {strides = array<i32>} : memref<16x1152xf32, #tpu.memory_space<vmem>>, vector<4x128xf32>,
    %c0_129 = arith.constant 0 : index
    %c0_130 = arith.constant 0 : index
    %c0_131 = arith.constant 0 : index
    %c1_132 = arith.constant 1 : index
    %c0_133 = arith.constant 0 : index
    %86 = vector.load %arg5[%c0_129, %c0_130, %c0_131, %c1_132, %c0_133] : memref<2x2x5x5x128xf32, #tpu.memory_space<vmem>>, vector<1x1x1x4x128xf32>
    %87 = vector.shape_cast %86 : vector<1x1x1x4x128xf32> to vector<4x128xf32>
    %c0_134 = arith.constant 0 : index
    %c256 = arith.constant 256 : index
    %88 = vector.load %arg6[%c0_134, %c256] : memref<16x1152xf32, #tpu.memory_space<vmem>>, vector<4x128xf32>
    tpu.vector_store %arg6[%c0_134, %c256], %87 {strides = array<i32>} : memref<16x1152xf32, #tpu.memory_space<vmem>>, vector<4x128xf32>,
    %c0_135 = arith.constant 0 : index
    %c0_136 = arith.constant 0 : index
    %c1_137 = arith.constant 1 : index
    %c1_138 = arith.constant 1 : index
    %c0_139 = arith.constant 0 : index
    %89 = vector.load %arg5[%c0_135, %c0_136, %c1_137, %c1_138, %c0_139] : memref<2x2x5x5x128xf32, #tpu.memory_space<vmem>>, vector<1x1x1x4x128xf32>
    %90 = vector.shape_cast %89 : vector<1x1x1x4x128xf32> to vector<4x128xf32>
    %c4_140 = arith.constant 4 : index
    %c256_141 = arith.constant 256 : index
    %91 = vector.load %arg6[%c4_140, %c256_141] : memref<16x1152xf32, #tpu.memory_space<vmem>>, vector<4x128xf32>
    tpu.vector_store %arg6[%c4_140, %c256_141], %90 {strides = array<i32>} : memref<16x1152xf32, #tpu.memory_space<vmem>>, vector<4x128xf32>,
    %c0_142 = arith.constant 0 : index
    %c0_143 = arith.constant 0 : index
    %c2_144 = arith.constant 2 : index
    %c1_145 = arith.constant 1 : index
    %c0_146 = arith.constant 0 : index
    %92 = vector.load %arg5[%c0_142, %c0_143, %c2_144, %c1_145, %c0_146] : memref<2x2x5x5x128xf32, #tpu.memory_space<vmem>>, vector<1x1x1x4x128xf32>
    %93 = vector.shape_cast %92 : vector<1x1x1x4x128xf32> to vector<4x128xf32>
    %c8_147 = arith.constant 8 : index
    %c256_148 = arith.constant 256 : index
    %94 = vector.load %arg6[%c8_147, %c256_148] : memref<16x1152xf32, #tpu.memory_space<vmem>>, vector<4x128xf32>
    tpu.vector_store %arg6[%c8_147, %c256_148], %93 {strides = array<i32>} : memref<16x1152xf32, #tpu.memory_space<vmem>>, vector<4x128xf32>,
    %c0_149 = arith.constant 0 : index
    %c0_150 = arith.constant 0 : index
    %c3_151 = arith.constant 3 : index
    %c1_152 = arith.constant 1 : index
    %c0_153 = arith.constant 0 : index
    %95 = vector.load %arg5[%c0_149, %c0_150, %c3_151, %c1_152, %c0_153] : memref<2x2x5x5x128xf32, #tpu.memory_space<vmem>>, vector<1x1x1x4x128xf32>
    %96 = vector.shape_cast %95 : vector<1x1x1x4x128xf32> to vector<4x128xf32>
    %c12_154 = arith.constant 12 : index
    %c256_155 = arith.constant 256 : index
    %97 = vector.load %arg6[%c12_154, %c256_155] : memref<16x1152xf32, #tpu.memory_space<vmem>>, vector<4x128xf32>
    tpu.vector_store %arg6[%c12_154, %c256_155], %96 {strides = array<i32>} : memref<16x1152xf32, #tpu.memory_space<vmem>>, vector<4x128xf32>,
    %c1_156 = arith.constant 1 : index
    %c0_157 = arith.constant 0 : index
    %c0_158 = arith.constant 0 : index
    %c0_159 = arith.constant 0 : index
    %c0_160 = arith.constant 0 : index
    %98 = vector.load %arg5[%c1_156, %c0_157, %c0_158, %c0_159, %c0_160] : memref<2x2x5x5x128xf32, #tpu.memory_space<vmem>>, vector<1x1x1x4x128xf32>
    %99 = vector.shape_cast %98 : vector<1x1x1x4x128xf32> to vector<4x128xf32>
    %c0_161 = arith.constant 0 : index
    %c384 = arith.constant 384 : index
    %100 = vector.load %arg6[%c0_161, %c384] : memref<16x1152xf32, #tpu.memory_space<vmem>>, vector<4x128xf32>
    tpu.vector_store %arg6[%c0_161, %c384], %99 {strides = array<i32>} : memref<16x1152xf32, #tpu.memory_space<vmem>>, vector<4x128xf32>,
    %c1_162 = arith.constant 1 : index
    %c0_163 = arith.constant 0 : index
    %c1_164 = arith.constant 1 : index
    %c0_165 = arith.constant 0 : index
    %c0_166 = arith.constant 0 : index
    %101 = vector.load %arg5[%c1_162, %c0_163, %c1_164, %c0_165, %c0_166] : memref<2x2x5x5x128xf32, #tpu.memory_space<vmem>>, vector<1x1x1x4x128xf32>
    %102 = vector.shape_cast %101 : vector<1x1x1x4x128xf32> to vector<4x128xf32>
    %c4_167 = arith.constant 4 : index
    %c384_168 = arith.constant 384 : index
    %103 = vector.load %arg6[%c4_167, %c384_168] : memref<16x1152xf32, #tpu.memory_space<vmem>>, vector<4x128xf32>
    tpu.vector_store %arg6[%c4_167, %c384_168], %102 {strides = array<i32>} : memref<16x1152xf32, #tpu.memory_space<vmem>>, vector<4x128xf32>,
    %c1_169 = arith.constant 1 : index
    %c0_170 = arith.constant 0 : index
    %c2_171 = arith.constant 2 : index
    %c0_172 = arith.constant 0 : index
    %c0_173 = arith.constant 0 : index
    %104 = vector.load %arg5[%c1_169, %c0_170, %c2_171, %c0_172, %c0_173] : memref<2x2x5x5x128xf32, #tpu.memory_space<vmem>>, vector<1x1x1x4x128xf32>
    %105 = vector.shape_cast %104 : vector<1x1x1x4x128xf32> to vector<4x128xf32>
    %c8_174 = arith.constant 8 : index
    %c384_175 = arith.constant 384 : index
    %106 = vector.load %arg6[%c8_174, %c384_175] : memref<16x1152xf32, #tpu.memory_space<vmem>>, vector<4x128xf32>
    tpu.vector_store %arg6[%c8_174, %c384_175], %105 {strides = array<i32>} : memref<16x1152xf32, #tpu.memory_space<vmem>>, vector<4x128xf32>,
    %c1_176 = arith.constant 1 : index
    %c0_177 = arith.constant 0 : index
    %c3_178 = arith.constant 3 : index
    %c0_179 = arith.constant 0 : index
    %c0_180 = arith.constant 0 : index
    %107 = vector.load %arg5[%c1_176, %c0_177, %c3_178, %c0_179, %c0_180] : memref<2x2x5x5x128xf32, #tpu.memory_space<vmem>>, vector<1x1x1x4x128xf32>
    %108 = vector.shape_cast %107 : vector<1x1x1x4x128xf32> to vector<4x128xf32>
    %c12_181 = arith.constant 12 : index
    %c384_182 = arith.constant 384 : index
    %109 = vector.load %arg6[%c12_181, %c384_182] : memref<16x1152xf32, #tpu.memory_space<vmem>>, vector<4x128xf32>
    tpu.vector_store %arg6[%c12_181, %c384_182], %108 {strides = array<i32>} : memref<16x1152xf32, #tpu.memory_space<vmem>>, vector<4x128xf32>,
    %c1_183 = arith.constant 1 : index
    %c1_184 = arith.constant 1 : index
    %c0_185 = arith.constant 0 : index
    %c0_186 = arith.constant 0 : index
    %c0_187 = arith.constant 0 : index
    %110 = vector.load %arg5[%c1_183, %c1_184, %c0_185, %c0_186, %c0_187] : memref<2x2x5x5x128xf32, #tpu.memory_space<vmem>>, vector<1x1x1x4x128xf32>
    %111 = vector.shape_cast %110 : vector<1x1x1x4x128xf32> to vector<4x128xf32>
    %c0_188 = arith.constant 0 : index
    %c512 = arith.constant 512 : index
    %112 = vector.load %arg6[%c0_188, %c512] : memref<16x1152xf32, #tpu.memory_space<vmem>>, vector<4x128xf32>
    tpu.vector_store %arg6[%c0_188, %c512], %111 {strides = array<i32>} : memref<16x1152xf32, #tpu.memory_space<vmem>>, vector<4x128xf32>,
    %c1_189 = arith.constant 1 : index
    %c1_190 = arith.constant 1 : index
    %c1_191 = arith.constant 1 : index
    %c0_192 = arith.constant 0 : index
    %c0_193 = arith.constant 0 : index
    %113 = vector.load %arg5[%c1_189, %c1_190, %c1_191, %c0_192, %c0_193] : memref<2x2x5x5x128xf32, #tpu.memory_space<vmem>>, vector<1x1x1x4x128xf32>
    %114 = vector.shape_cast %113 : vector<1x1x1x4x128xf32> to vector<4x128xf32>
    %c4_194 = arith.constant 4 : index
    %c512_195 = arith.constant 512 : index
    %115 = vector.load %arg6[%c4_194, %c512_195] : memref<16x1152xf32, #tpu.memory_space<vmem>>, vector<4x128xf32>
    tpu.vector_store %arg6[%c4_194, %c512_195], %114 {strides = array<i32>} : memref<16x1152xf32, #tpu.memory_space<vmem>>, vector<4x128xf32>,
    %c1_196 = arith.constant 1 : index
    %c1_197 = arith.constant 1 : index
    %c2_198 = arith.constant 2 : index
    %c0_199 = arith.constant 0 : index
    %c0_200 = arith.constant 0 : index
    %116 = vector.load %arg5[%c1_196, %c1_197, %c2_198, %c0_199, %c0_200] : memref<2x2x5x5x128xf32, #tpu.memory_space<vmem>>, vector<1x1x1x4x128xf32>
    %117 = vector.shape_cast %116 : vector<1x1x1x4x128xf32> to vector<4x128xf32>
    %c8_201 = arith.constant 8 : index
    %c512_202 = arith.constant 512 : index
    %118 = vector.load %arg6[%c8_201, %c512_202] : memref<16x1152xf32, #tpu.memory_space<vmem>>, vector<4x128xf32>
    tpu.vector_store %arg6[%c8_201, %c512_202], %117 {strides = array<i32>} : memref<16x1152xf32, #tpu.memory_space<vmem>>, vector<4x128xf32>,
    %c1_203 = arith.constant 1 : index
    %c1_204 = arith.constant 1 : index
    %c3_205 = arith.constant 3 : index
    %c0_206 = arith.constant 0 : index
    %c0_207 = arith.constant 0 : index
    %119 = vector.load %arg5[%c1_203, %c1_204, %c3_205, %c0_206, %c0_207] : memref<2x2x5x5x128xf32, #tpu.memory_space<vmem>>, vector<1x1x1x4x128xf32>
    %120 = vector.shape_cast %119 : vector<1x1x1x4x128xf32> to vector<4x128xf32>
    %c12_208 = arith.constant 12 : index
    %c512_209 = arith.constant 512 : index
    %121 = vector.load %arg6[%c12_208, %c512_209] : memref<16x1152xf32, #tpu.memory_space<vmem>>, vector<4x128xf32>
    tpu.vector_store %arg6[%c12_208, %c512_209], %120 {strides = array<i32>} : memref<16x1152xf32, #tpu.memory_space<vmem>>, vector<4x128xf32>,
    %c1_210 = arith.constant 1 : index
    %c0_211 = arith.constant 0 : index
    %c0_212 = arith.constant 0 : index
    %c1_213 = arith.constant 1 : index
    %c0_214 = arith.constant 0 : index
    %122 = vector.load %arg5[%c1_210, %c0_211, %c0_212, %c1_213, %c0_214] : memref<2x2x5x5x128xf32, #tpu.memory_space<vmem>>, vector<1x1x1x4x128xf32>
    %123 = vector.shape_cast %122 : vector<1x1x1x4x128xf32> to vector<4x128xf32>
    %c0_215 = arith.constant 0 : index
    %c640 = arith.constant 640 : index
    %124 = vector.load %arg6[%c0_215, %c640] : memref<16x1152xf32, #tpu.memory_space<vmem>>, vector<4x128xf32>
    tpu.vector_store %arg6[%c0_215, %c640], %123 {strides = array<i32>} : memref<16x1152xf32, #tpu.memory_space<vmem>>, vector<4x128xf32>,
    %c1_216 = arith.constant 1 : index
    %c0_217 = arith.constant 0 : index
    %c1_218 = arith.constant 1 : index
    %c1_219 = arith.constant 1 : index
    %c0_220 = arith.constant 0 : index
    %125 = vector.load %arg5[%c1_216, %c0_217, %c1_218, %c1_219, %c0_220] : memref<2x2x5x5x128xf32, #tpu.memory_space<vmem>>, vector<1x1x1x4x128xf32>
    %126 = vector.shape_cast %125 : vector<1x1x1x4x128xf32> to vector<4x128xf32>
    %c4_221 = arith.constant 4 : index
    %c640_222 = arith.constant 640 : index
    %127 = vector.load %arg6[%c4_221, %c640_222] : memref<16x1152xf32, #tpu.memory_space<vmem>>, vector<4x128xf32>
    tpu.vector_store %arg6[%c4_221, %c640_222], %126 {strides = array<i32>} : memref<16x1152xf32, #tpu.memory_space<vmem>>, vector<4x128xf32>,
    %c1_223 = arith.constant 1 : index
    %c0_224 = arith.constant 0 : index
    %c2_225 = arith.constant 2 : index
    %c1_226 = arith.constant 1 : index
    %c0_227 = arith.constant 0 : index
    %128 = vector.load %arg5[%c1_223, %c0_224, %c2_225, %c1_226, %c0_227] : memref<2x2x5x5x128xf32, #tpu.memory_space<vmem>>, vector<1x1x1x4x128xf32>
    %129 = vector.shape_cast %128 : vector<1x1x1x4x128xf32> to vector<4x128xf32>
    %c8_228 = arith.constant 8 : index
    %c640_229 = arith.constant 640 : index
    %130 = vector.load %arg6[%c8_228, %c640_229] : memref<16x1152xf32, #tpu.memory_space<vmem>>, vector<4x128xf32>
    tpu.vector_store %arg6[%c8_228, %c640_229], %129 {strides = array<i32>} : memref<16x1152xf32, #tpu.memory_space<vmem>>, vector<4x128xf32>,
    %c1_230 = arith.constant 1 : index
    %c0_231 = arith.constant 0 : index
    %c3_232 = arith.constant 3 : index
    %c1_233 = arith.constant 1 : index
    %c0_234 = arith.constant 0 : index
    %131 = vector.load %arg5[%c1_230, %c0_231, %c3_232, %c1_233, %c0_234] : memref<2x2x5x5x128xf32, #tpu.memory_space<vmem>>, vector<1x1x1x4x128xf32>
    %132 = vector.shape_cast %131 : vector<1x1x1x4x128xf32> to vector<4x128xf32>
    %c12_235 = arith.constant 12 : index
    %c640_236 = arith.constant 640 : index
    %133 = vector.load %arg6[%c12_235, %c640_236] : memref<16x1152xf32, #tpu.memory_space<vmem>>, vector<4x128xf32>
    tpu.vector_store %arg6[%c12_235, %c640_236], %132 {strides = array<i32>} : memref<16x1152xf32, #tpu.memory_space<vmem>>, vector<4x128xf32>,
    %c0_237 = arith.constant 0 : index
    %c0_238 = arith.constant 0 : index
    %c1_239 = arith.constant 1 : index
    %c0_240 = arith.constant 0 : index
    %c0_241 = arith.constant 0 : index
    %134 = vector.load %arg5[%c0_237, %c0_238, %c1_239, %c0_240, %c0_241] : memref<2x2x5x5x128xf32, #tpu.memory_space<vmem>>, vector<1x1x1x4x128xf32>
    %135 = vector.shape_cast %134 : vector<1x1x1x4x128xf32> to vector<4x128xf32>
    %c0_242 = arith.constant 0 : index
    %c768 = arith.constant 768 : index
    %136 = vector.load %arg6[%c0_242, %c768] : memref<16x1152xf32, #tpu.memory_space<vmem>>, vector<4x128xf32>
    tpu.vector_store %arg6[%c0_242, %c768], %135 {strides = array<i32>} : memref<16x1152xf32, #tpu.memory_space<vmem>>, vector<4x128xf32>,
    %c0_243 = arith.constant 0 : index
    %c0_244 = arith.constant 0 : index
    %c2_245 = arith.constant 2 : index
    %c0_246 = arith.constant 0 : index
    %c0_247 = arith.constant 0 : index
    %137 = vector.load %arg5[%c0_243, %c0_244, %c2_245, %c0_246, %c0_247] : memref<2x2x5x5x128xf32, #tpu.memory_space<vmem>>, vector<1x1x1x4x128xf32>
    %138 = vector.shape_cast %137 : vector<1x1x1x4x128xf32> to vector<4x128xf32>
    %c4_248 = arith.constant 4 : index
    %c768_249 = arith.constant 768 : index
    %139 = vector.load %arg6[%c4_248, %c768_249] : memref<16x1152xf32, #tpu.memory_space<vmem>>, vector<4x128xf32>
    tpu.vector_store %arg6[%c4_248, %c768_249], %138 {strides = array<i32>} : memref<16x1152xf32, #tpu.memory_space<vmem>>, vector<4x128xf32>,
    %c0_250 = arith.constant 0 : index
    %c0_251 = arith.constant 0 : index
    %c3_252 = arith.constant 3 : index
    %c0_253 = arith.constant 0 : index
    %c0_254 = arith.constant 0 : index
    %140 = vector.load %arg5[%c0_250, %c0_251, %c3_252, %c0_253, %c0_254] : memref<2x2x5x5x128xf32, #tpu.memory_space<vmem>>, vector<1x1x1x4x128xf32>
    %141 = vector.shape_cast %140 : vector<1x1x1x4x128xf32> to vector<4x128xf32>
    %c8_255 = arith.constant 8 : index
    %c768_256 = arith.constant 768 : index
    %142 = vector.load %arg6[%c8_255, %c768_256] : memref<16x1152xf32, #tpu.memory_space<vmem>>, vector<4x128xf32>
    tpu.vector_store %arg6[%c8_255, %c768_256], %141 {strides = array<i32>} : memref<16x1152xf32, #tpu.memory_space<vmem>>, vector<4x128xf32>,
    %c0_257 = arith.constant 0 : index
    %c0_258 = arith.constant 0 : index
    %c4_259 = arith.constant 4 : index
    %c0_260 = arith.constant 0 : index
    %c0_261 = arith.constant 0 : index
    %143 = vector.load %arg5[%c0_257, %c0_258, %c4_259, %c0_260, %c0_261] : memref<2x2x5x5x128xf32, #tpu.memory_space<vmem>>, vector<1x1x1x4x128xf32>
    %144 = vector.shape_cast %143 : vector<1x1x1x4x128xf32> to vector<4x128xf32>
    %c12_262 = arith.constant 12 : index
    %c768_263 = arith.constant 768 : index
    %145 = vector.load %arg6[%c12_262, %c768_263] : memref<16x1152xf32, #tpu.memory_space<vmem>>, vector<4x128xf32>
    tpu.vector_store %arg6[%c12_262, %c768_263], %144 {strides = array<i32>} : memref<16x1152xf32, #tpu.memory_space<vmem>>, vector<4x128xf32>,
    %c0_264 = arith.constant 0 : index
    %c1_265 = arith.constant 1 : index
    %c1_266 = arith.constant 1 : index
    %c0_267 = arith.constant 0 : index
    %c0_268 = arith.constant 0 : index
    %146 = vector.load %arg5[%c0_264, %c1_265, %c1_266, %c0_267, %c0_268] : memref<2x2x5x5x128xf32, #tpu.memory_space<vmem>>, vector<1x1x1x4x128xf32>
    %147 = vector.shape_cast %146 : vector<1x1x1x4x128xf32> to vector<4x128xf32>
    %c0_269 = arith.constant 0 : index
    %c896 = arith.constant 896 : index
    %148 = vector.load %arg6[%c0_269, %c896] : memref<16x1152xf32, #tpu.memory_space<vmem>>, vector<4x128xf32>
    tpu.vector_store %arg6[%c0_269, %c896], %147 {strides = array<i32>} : memref<16x1152xf32, #tpu.memory_space<vmem>>, vector<4x128xf32>,
    %c0_270 = arith.constant 0 : index
    %c1_271 = arith.constant 1 : index
    %c2_272 = arith.constant 2 : index
    %c0_273 = arith.constant 0 : index
    %c0_274 = arith.constant 0 : index
    %149 = vector.load %arg5[%c0_270, %c1_271, %c2_272, %c0_273, %c0_274] : memref<2x2x5x5x128xf32, #tpu.memory_space<vmem>>, vector<1x1x1x4x128xf32>
    %150 = vector.shape_cast %149 : vector<1x1x1x4x128xf32> to vector<4x128xf32>
    %c4_275 = arith.constant 4 : index
    %c896_276 = arith.constant 896 : index
    %151 = vector.load %arg6[%c4_275, %c896_276] : memref<16x1152xf32, #tpu.memory_space<vmem>>, vector<4x128xf32>
    tpu.vector_store %arg6[%c4_275, %c896_276], %150 {strides = array<i32>} : memref<16x1152xf32, #tpu.memory_space<vmem>>, vector<4x128xf32>,
    %c0_277 = arith.constant 0 : index
    %c1_278 = arith.constant 1 : index
    %c3_279 = arith.constant 3 : index
    %c0_280 = arith.constant 0 : index
    %c0_281 = arith.constant 0 : index
    %152 = vector.load %arg5[%c0_277, %c1_278, %c3_279, %c0_280, %c0_281] : memref<2x2x5x5x128xf32, #tpu.memory_space<vmem>>, vector<1x1x1x4x128xf32>
    %153 = vector.shape_cast %152 : vector<1x1x1x4x128xf32> to vector<4x128xf32>
    %c8_282 = arith.constant 8 : index
    %c896_283 = arith.constant 896 : index
    %154 = vector.load %arg6[%c8_282, %c896_283] : memref<16x1152xf32, #tpu.memory_space<vmem>>, vector<4x128xf32>
    tpu.vector_store %arg6[%c8_282, %c896_283], %153 {strides = array<i32>} : memref<16x1152xf32, #tpu.memory_space<vmem>>, vector<4x128xf32>,
    %c0_284 = arith.constant 0 : index
    %c1_285 = arith.constant 1 : index
    %c4_286 = arith.constant 4 : index
    %c0_287 = arith.constant 0 : index
    %c0_288 = arith.constant 0 : index
    %155 = vector.load %arg5[%c0_284, %c1_285, %c4_286, %c0_287, %c0_288] : memref<2x2x5x5x128xf32, #tpu.memory_space<vmem>>, vector<1x1x1x4x128xf32>
    %156 = vector.shape_cast %155 : vector<1x1x1x4x128xf32> to vector<4x128xf32>
    %c12_289 = arith.constant 12 : index
    %c896_290 = arith.constant 896 : index
    %157 = vector.load %arg6[%c12_289, %c896_290] : memref<16x1152xf32, #tpu.memory_space<vmem>>, vector<4x128xf32>
    tpu.vector_store %arg6[%c12_289, %c896_290], %156 {strides = array<i32>} : memref<16x1152xf32, #tpu.memory_space<vmem>>, vector<4x128xf32>,
    %c0_291 = arith.constant 0 : index
    %c0_292 = arith.constant 0 : index
    %c1_293 = arith.constant 1 : index
    %c1_294 = arith.constant 1 : index
    %c0_295 = arith.constant 0 : index
    %158 = vector.load %arg5[%c0_291, %c0_292, %c1_293, %c1_294, %c0_295] : memref<2x2x5x5x128xf32, #tpu.memory_space<vmem>>, vector<1x1x1x4x128xf32>
    %159 = vector.shape_cast %158 : vector<1x1x1x4x128xf32> to vector<4x128xf32>
    %c0_296 = arith.constant 0 : index
    %c1024 = arith.constant 1024 : index
    %160 = vector.load %arg6[%c0_296, %c1024] : memref<16x1152xf32, #tpu.memory_space<vmem>>, vector<4x128xf32>
    tpu.vector_store %arg6[%c0_296, %c1024], %159 {strides = array<i32>} : memref<16x1152xf32, #tpu.memory_space<vmem>>, vector<4x128xf32>,
    %c0_297 = arith.constant 0 : index
    %c0_298 = arith.constant 0 : index
    %c2_299 = arith.constant 2 : index
    %c1_300 = arith.constant 1 : index
    %c0_301 = arith.constant 0 : index
    %161 = vector.load %arg5[%c0_297, %c0_298, %c2_299, %c1_300, %c0_301] : memref<2x2x5x5x128xf32, #tpu.memory_space<vmem>>, vector<1x1x1x4x128xf32>
    %162 = vector.shape_cast %161 : vector<1x1x1x4x128xf32> to vector<4x128xf32>
    %c4_302 = arith.constant 4 : index
    %c1024_303 = arith.constant 1024 : index
    %163 = vector.load %arg6[%c4_302, %c1024_303] : memref<16x1152xf32, #tpu.memory_space<vmem>>, vector<4x128xf32>
    tpu.vector_store %arg6[%c4_302, %c1024_303], %162 {strides = array<i32>} : memref<16x1152xf32, #tpu.memory_space<vmem>>, vector<4x128xf32>,
    %c0_304 = arith.constant 0 : index
    %c0_305 = arith.constant 0 : index
    %c3_306 = arith.constant 3 : index
    %c1_307 = arith.constant 1 : index
    %c0_308 = arith.constant 0 : index
    %164 = vector.load %arg5[%c0_304, %c0_305, %c3_306, %c1_307, %c0_308] : memref<2x2x5x5x128xf32, #tpu.memory_space<vmem>>, vector<1x1x1x4x128xf32>
    %165 = vector.shape_cast %164 : vector<1x1x1x4x128xf32> to vector<4x128xf32>
    %c8_309 = arith.constant 8 : index
    %c1024_310 = arith.constant 1024 : index
    %166 = vector.load %arg6[%c8_309, %c1024_310] : memref<16x1152xf32, #tpu.memory_space<vmem>>, vector<4x128xf32>
    tpu.vector_store %arg6[%c8_309, %c1024_310], %165 {strides = array<i32>} : memref<16x1152xf32, #tpu.memory_space<vmem>>, vector<4x128xf32>,
    %c0_311 = arith.constant 0 : index
    %c0_312 = arith.constant 0 : index
    %c4_313 = arith.constant 4 : index
    %c1_314 = arith.constant 1 : index
    %c0_315 = arith.constant 0 : index
    %167 = vector.load %arg5[%c0_311, %c0_312, %c4_313, %c1_314, %c0_315] : memref<2x2x5x5x128xf32, #tpu.memory_space<vmem>>, vector<1x1x1x4x128xf32>
    %168 = vector.shape_cast %167 : vector<1x1x1x4x128xf32> to vector<4x128xf32>
    %c12_316 = arith.constant 12 : index
    %c1024_317 = arith.constant 1024 : index
    %169 = vector.load %arg6[%c12_316, %c1024_317] : memref<16x1152xf32, #tpu.memory_space<vmem>>, vector<4x128xf32>
    tpu.vector_store %arg6[%c12_316, %c1024_317], %168 {strides = array<i32>} : memref<16x1152xf32, #tpu.memory_space<vmem>>, vector<4x128xf32>,
    %c0_318 = arith.constant 0 : index
    %c0_319 = arith.constant 0 : index
    %170 = vector.load %arg6[%c0_318, %c0_319] : memref<16x1152xf32, #tpu.memory_space<vmem>>, vector<16x1152xf32>
    %c0_320 = arith.constant 0 : index
    %c0_321 = arith.constant 0 : index
    %171 = vector.load %arg3[%c0_320, %c0_321] : memref<1152x128xf32, #tpu.memory_space<vmem>>, vector<1152x128xf32>
    %cst_322 = arith.constant dense<0.000000e+00> : vector<16x128xf32>
    %172 = tpu.matmul %170, %171, %cst_322 {dimension_numbers = #tpu.dot_dimension_numbers<[1], [0], [0], [1], [0, 0, 1, 1], [], []>} : vector<16x1152xf32>, vector<1152x128xf32>, vector<16x128xf32> -> vector<16x128xf32>
    %c0_323 = arith.constant 0 : index
    %c0_324 = arith.constant 0 : index
    %c0_325 = arith.constant 0 : index
    %173 = vector.load %arg4[%c0_323, %c0_324, %c0_325] : memref<1x16x128xf32, #tpu.memory_space<vmem>>, vector<1x16x128xf32>
    %174 = vector.shape_cast %173 : vector<1x16x128xf32> to vector<16x128xf32>
    %175 = vector.shape_cast %172 : vector<16x128xf32> to vector<1x16x128xf32>
    tpu.vector_store %arg4[%c0_323, %c0_324, %c0_325], %175 {strides = array<i32>} : memref<1x16x128xf32, #tpu.memory_space<vmem>>, vector<1x16x128xf32>,
    return
  }
  func.func @transform_0(%arg0: i32) -> (i32, i32, i32) {
    %c0_i32 = arith.constant 0 : i32
    %c0_i32_0 = arith.constant 0 : i32
    %c0_i32_1 = arith.constant 0 : i32
    return %arg0, %c0_i32, %c0_i32_0 : i32, i32, i32
  }
  func.func @transform_1(%arg0: i32) -> (i32, i32) {
    %c0_i32 = arith.constant 0 : i32
    %c0_i32_0 = arith.constant 0 : i32
    %c0_i32_1 = arith.constant 0 : i32
    return %c0_i32, %c0_i32_0 : i32, i32
  }
  func.func @transform_2(%arg0: i32) -> (i32, i32) {
    %c0_i32 = arith.constant 0 : i32
    %c0_i32_0 = arith.constant 0 : i32
    %c0_i32_1 = arith.constant 0 : i32
    return %c0_i32, %c0_i32_0 : i32, i32
  }
  func.func @transform_3(%arg0: i32) -> (i32, i32, i32) {
    %c0_i32 = arith.constant 0 : i32
    %c0_i32_0 = arith.constant 0 : i32
    %c0_i32_1 = arith.constant 0 : i32
    return %arg0, %c0_i32, %c0_i32_0 : i32, i32, i32
  }
}

</mosaic_0001>

<llo_original>
// kernel: stn_encoder_forward.1
$region0: #{stn_encoder_forward.1}
  #allocation0 [shape = 'u32[]', space=smem, size = 0x4, offset = 0x4, fixed_abs, tag = 'smem constant byte address 0x4 - core index']
  #allocation1 [shape = 'u32[144,128]{1,0:T(1,128)}', space=vmem, size = 0x12000, scoped, tag = 'internal scratch']
  #allocation2 [shape = 'f32[2,2,5,5,128]{4,3,2,1,0:T(8,128)}', space=vmem, size = 0x14000, scoped, tag = 'scratch operand']
  #allocation3 [shape = 'f32[16,1152]{1,0:T(8,128)}', space=vmem, size = 0x12000, scoped, tag = 'scratch operand']
  %s0 = inlined_call_operand.vmem [shape: f32[4,56,216], index: 0, kind: input, shape index: {}]
  %s1 = inlined_call_operand.vmem [shape: f32[216,128], index: 1, kind: input, shape index: {}]
  %s2 = inlined_call_operand.vmem [shape: f32[1152,128], index: 2, kind: input, shape index: {}]
  %s3 = inlined_call_operand.vmem [shape: f32[4,16,128], index: 3, kind: output, shape index: {}]
  %s4 = sld [smem:[#allocation0]]
  $region45: #{stn_encoder_forward.1} parent=0
    _
  %s6 = ssub.s32 1, %s4
  %s7 = scalar_select 0, %s6, %s4
  loop: start=0, step=1, limit=6
  $region2: #{stn_encoder_forward.1} parent=0 // loop_pre_header
    _
  $region3: #{stn_encoder_forward.1} parent=0 // loop_header
    %s9 = sphi 0, %s13
    %p10 = scmp.ge.s32.totalorder %s9, 6
    %s19 = sphi 0, %s21
    %s22 = sphi 0, %s19
    %s23 = sphi 0, %s22
    %s39 = sphi 0, %s23
    %s43 = sphi 0, %s43
    %s45 = sphi 0, %s43
    %s46 = sphi 0, %s45
    %s60 = sphi 0, %s46
    %s64 = sphi 0, %s64
    %s66 = sphi 0, %s64
    %s67 = sphi 0, %s66
    %s81 = sphi 0, %s67
    %s87 = sphi 0, %s89
    %s90 = sphi 0, %s87
    %s91 = sphi 0, %s90
    %s107 = sphi 0, %s91
  $region4: #{stn_encoder_forward.1} parent=0 // loop_header_branch
    %12 = sbr.rel (%p10) target = $region8
  $region5: #{stn_encoder_forward.1} parent=0 // loop_body
    %s14 = ssub.s32 %s9, 1
    %s15 = ssub.s32 %s9, 2
    %s16 = sadd.s32 %s9, 1
    %s17 = ssub.s32 %s9, %s16
    %p18 = scmp.eq.s32.totalorder %s17, 0
    %s20 = sadd.s32 %s19, 1
    %s21 = scalar_select %p18, %s19, %s20
    %p24 = pneg %p18
    %p25 = scmp.eq.s32.totalorder %s9, 3
    %p26 = por %p24, %p25
    %p27 = scmp.ne.s32.totalorder %s19, %s22
    %p28 = scmp.eq.s32.totalorder %s9, 0
    %p29 = por %p27, %p28
    %p30 = scmp.ne.s32.totalorder %s19, %s22
    %p31 = scmp.eq.s32.totalorder %s14, 3
    %p32 = por %p30, %p31
    %p33 = scmp.ne.s32.totalorder %s22, %s23
    %p34 = scmp.eq.s32.totalorder %s14, 0
    %p35 = por %p33, %p34
    %p36 = scmp.ne.s32.totalorder %s22, %s23
    %p37 = scmp.eq.s32.totalorder %s15, 3
    %p38 = por %p36, %p37
    %p40 = scmp.ne.s32.totalorder %s23, %s39
    %p41 = scmp.eq.s32.totalorder %s15, 0
    %p42 = por %p40, %p41
    %s44 = sadd.s32 %s43, 1
    %p47 = scmp.eq.s32.totalorder %s9, 3
    %p48 = scmp.ne.s32.totalorder %s43, %s45
    %p49 = scmp.eq.s32.totalorder %s9, 0
    %p50 = por %p48, %p49
    %p51 = scmp.ne.s32.totalorder %s43, %s45
    %p52 = scmp.eq.s32.totalorder %s14, 3
    %p53 = por %p51, %p52
    %p54 = scmp.ne.s32.totalorder %s45, %s46
    %p55 = scmp.eq.s32.totalorder %s14, 0
    %p56 = por %p54, %p55
    %p57 = scmp.ne.s32.totalorder %s45, %s46
    %p58 = scmp.eq.s32.totalorder %s15, 3
    %p59 = por %p57, %p58
    %p61 = scmp.ne.s32.totalorder %s46, %s60
    %p62 = scmp.eq.s32.totalorder %s15, 0
    %p63 = por %p61, %p62
    %s65 = sadd.s32 %s64, 1
    %p68 = scmp.eq.s32.totalorder %s9, 3
    %p69 = scmp.ne.s32.totalorder %s64, %s66
    %p70 = scmp.eq.s32.totalorder %s9, 0
    %p71 = por %p69, %p70
    %p72 = scmp.ne.s32.totalorder %s64, %s66
    %p73 = scmp.eq.s32.totalorder %s14, 3
    %p74 = por %p72, %p73
    %p75 = scmp.ne.s32.totalorder %s66, %s67
    %p76 = scmp.eq.s32.totalorder %s14, 0
    %p77 = por %p75, %p76
    %p78 = scmp.ne.s32.totalorder %s66, %s67
    %p79 = scmp.eq.s32.totalorder %s15, 3
    %p80 = por %p78, %p79
    %p82 = scmp.ne.s32.totalorder %s67, %s81
    %p83 = scmp.eq.s32.totalorder %s15, 0
    %p84 = por %p82, %p83
    %s85 = ssub.s32 %s9, %s16
    %p86 = scmp.eq.s32.totalorder %s85, 0
    %s88 = sadd.s32 %s87, 1
    %s89 = scalar_select %p86, %s87, %s88
    %p92 = pneg %p86
    %p93 = scmp.eq.s32.totalorder %s9, 3
    %p94 = por %p92, %p93
    %p95 = scmp.ne.s32.totalorder %s87, %s90
    %p96 = scmp.eq.s32.totalorder %s9, 0
    %p97 = por %p95, %p96
    %p98 = scmp.ne.s32.totalorder %s87, %s90
    %p99 = scmp.eq.s32.totalorder %s14, 3
    %p100 = por %p98, %p99
    %p101 = scmp.ne.s32.totalorder %s90, %s91
    %p102 = scmp.eq.s32.totalorder %s14, 0
    %p103 = por %p101, %p102
    %p104 = scmp.ne.s32.totalorder %s90, %s91
    %p105 = scmp.eq.s32.totalorder %s15, 3
    %p106 = por %p104, %p105
    %p108 = scmp.ne.s32.totalorder %s91, %s107
    %p109 = scmp.eq.s32.totalorder %s15, 0
    %p110 = por %p108, %p109
    %p111 = scmp.le.s32.totalorder 1, %s9
    %p112 = scmp.lt.s32.totalorder %s9, 5
    %p113 = pnand %p111, %p112
    %p114 = pneg %p113
    // Predicated region
    $region9: #{stn_encoder_forward.1} parent=5 // pred_check
      _
    $region10: #{stn_encoder_forward.1} parent=5 // pred_check_branch
      %116 = sbr.rel (%p113) target = $region12
    $region11: #{stn_encoder_forward.1} parent=5 // pred_region
      %s117 = ssub.s32 %s9, 1
      // Predicated region
      $region13: #{stn_encoder_forward.1} parent=11 // pred_check
        %p118 = pneg %p56
      $region14: #{stn_encoder_forward.1} parent=11 // pred_check_branch
        %120 = sbr.rel (%p118) target = $region16
      $region15: #{stn_encoder_forward.1} parent=11 // pred_region
        _
      $region16: #{stn_encoder_forward.1} parent=11 // pred_fallthru
        _
      // Predicated region
      $region17: #{stn_encoder_forward.1} parent=11 // pred_check
        %p121 = pneg %p77
      $region18: #{stn_encoder_forward.1} parent=11 // pred_check_branch
        %123 = sbr.rel (%p121) target = $region20
      $region19: #{stn_encoder_forward.1} parent=11 // pred_region
        _
      $region20: #{stn_encoder_forward.1} parent=11 // pred_fallthru
        _
    $region12: #{stn_encoder_forward.1} parent=5 // pred_fallthru
      _
    %p124 = scmp.lt.s32.totalorder %s9, 4
    // Predicated region
    $region21: #{stn_encoder_forward.1} parent=5 // pred_check
      %p125 = pneg %p124
    $region22: #{stn_encoder_forward.1} parent=5 // pred_check_branch
      %127 = sbr.rel (%p125) target = $region24
    $region23: #{stn_encoder_forward.1} parent=5 // pred_region
      // Predicated region
      $region25: #{stn_encoder_forward.1} parent=23 // pred_check
        %p128 = pneg %p29
      $region26: #{stn_encoder_forward.1} parent=23 // pred_check_branch
        %130 = sbr.rel (%p128) target = $region28
      $region27: #{stn_encoder_forward.1} parent=23 // pred_region
        %p131 = scmp.lt.s32.totalorder %s9, 3
        %s132 = scalar_select %p131, %s9, 3
        %s133 = smul.addr %s132, 14
        %s134 = smul.addr %s133, 8
        %s135 = scalar_lea.vmem %s0, %s134
      $region28: #{stn_encoder_forward.1} parent=23 // pred_fallthru
        _
    $region24: #{stn_encoder_forward.1} parent=5 // pred_fallthru
      _
    %p136 = scmp.le.s32.totalorder 1, %s9
    %p137 = scmp.lt.s32.totalorder %s9, 5
    %p138 = pnand %p136, %p137
    %p139 = pneg %p138
    // Predicated region
    $region29: #{stn_encoder_forward.1} parent=5 // pred_check
      _
    $region30: #{stn_encoder_forward.1} parent=5 // pred_check_branch
      %141 = sbr.rel (%p138) target = $region32
    $region31: #{stn_encoder_forward.1} parent=5 // pred_region
      %s142 = ssub.s32 %s9, 1
      %p143 = scmp.lt.s32.totalorder %s14, 3
      %s144 = scalar_select %p143, %s14, 3
      %s145 = smul.addr %s144, 14
      %s146 = smul.addr %s145, 8
      %s147 = scalar_lea.vmem %s0, %s146
      %p148 = pneg %p35
      %p149 = pneg %p32
      %p150 = pneg %p56
      %p151 = pneg %p53
      %p152 = pneg %p77
      %p153 = pneg %p74
      %p154 = pneg %p103
      %p155 = pneg %p100
      %p156 = scmp.lt.s32.totalorder %s14, 3
      %s157 = scalar_select %p156, %s14, 3
      %s158 = smul.addr %s157, 2
      %s159 = smul.addr %s158, 8
      %s160 = scalar_lea.vmem %s3, %s159
      %p161 = scmp.lt.s32.totalorder %s14, 3
      %s162 = scalar_select %p161, %s14, 3
      %s163 = smul.addr %s162, 14
      %s164 = smul.addr %s163, 8
      %s165 = scalar_lea.vmem %s0, %s164
      %p166 = scmp.lt.s32.totalorder %s14, 3
      %s167 = scalar_select %p166, %s14, 3
      %s168 = smul.addr %s167, 2
      %s169 = smul.addr %s168, 8
      %s170 = scalar_lea.vmem %s3, %s169
      %v171 = vld [vmem:[%s165] sm:$0xff]
      %v172 = vld [vmem:[%s165 + $0x8] sm:$0xff]
      %v173 = vld [vmem:[%s165 + $0x10] sm:$0xff]
      %v174 = vld [vmem:[%s165 + $0x18] sm:$0xff]
      %v175 = vld [vmem:[%s165 + $0x20] sm:$0xff]
      %v176 = vld [vmem:[%s165 + $0x28] sm:$0xff]
      %v177 = vld [vmem:[%s165 + $0x30] sm:$0xff]
      %v178 = vld [vmem:[%s165 + $0x38] sm:$0xff]
      %v179 = vld [vmem:[%s165 + $0x40] sm:$0xff]
      %v180 = vld [vmem:[%s165 + $0x48] sm:$0xff]
      %v181 = vld [vmem:[%s165 + $0x50] sm:$0xff]
      %v182 = vld [vmem:[%s165 + $0x58] sm:$0xff]
      %v183 = vld [vmem:[%s165 + $0x60] sm:$0xff]
      %v184 = vld [vmem:[%s165 + $0x68] sm:$0xff]
      %v185 = vld [vmem:[%s1] sm:$0xff]
      %v186 = vld [vmem:[%s1 + $0x8] sm:$0xff]
      %v187 = vld [vmem:[%s1 + $0x10] sm:$0xff]
      %v188 = vld [vmem:[%s1 + $0x18] sm:$0xff]
      %v189 = vld [vmem:[%s1 + $0x20] sm:$0xff]
      %v190 = vld [vmem:[%s1 + $0x28] sm:$0xff]
      %v191 = vld [vmem:[%s1 + $0x30] sm:$0xff]
      %v192 = vld [vmem:[%s1 + $0x38] sm:$0xff]
      %v193 = vld [vmem:[%s1 + $0x40] sm:$0xff]
      %v194 = vld [vmem:[%s1 + $0x48] sm:$0xff]
      %v195 = vld [vmem:[%s1 + $0x50] sm:$0xff]
      %v196 = vld [vmem:[%s1 + $0x58] sm:$0xff]
      %v197 = vld [vmem:[%s1 + $0x60] sm:$0xff]
      %v198 = vld [vmem:[%s1 + $0x68] sm:$0xff]
      %v199 = vld [vmem:[%s1 + $0x70] sm:$0xff]
      %v200 = vld [vmem:[%s1 + $0x78] sm:$0xff]
      %v201 = vld [vmem:[%s1 + $0x80] sm:$0xff]
      %v202 = vld [vmem:[%s1 + $0x88] sm:$0xff]
      %v203 = vld [vmem:[%s1 + $0x90] sm:$0xff]
      %v204 = vld [vmem:[%s1 + $0x98] sm:$0xff]
      %v205 = vld [vmem:[%s1 + $0xa0] sm:$0xff]
      %v206 = vld [vmem:[%s1 + $0xa8] sm:$0xff]
      %v207 = vld [vmem:[%s1 + $0xb0] sm:$0xff]
      %v208 = vld [vmem:[%s1 + $0xb8] sm:$0xff]
      %v209 = vld [vmem:[%s1 + $0xc0] sm:$0xff]
      %v210 = vld [vmem:[%s1 + $0xc8] sm:$0xff]
      %v211 = vld [vmem:[%s1 + $0xd0] sm:$0xff]
      %vm212 = vcmask 719872
      %v214 = vsel %vm212, %v172, 0
      %v217 = vsel %vm212, %v174, 0
      %v220 = vsel %vm212, %v176, 0
      %v223 = vsel %vm212, %v178, 0
      %v226 = vsel %vm212, %v180, 0
      %v229 = vsel %vm212, %v182, 0
      %v232 = vsel %vm212, %v184, 0
      %234 = vmatprep.subr.mxu0 0.0
      %235 = vmatpush1.msra.mxu0 %v185
      %236 = vmatprep.subr.mxu0 0.0
      %237 = vmatpush1.msra.mxu0 %v186
      %238 = vmatprep.subr.mxu0 0.0
      %239 = vmatpush1.msra.mxu0 %v187
      %240 = vmatprep.subr.mxu0 0.0
      %241 = vmatpush1.msra.mxu0 %v188
      %242 = vmatprep.subr.mxu0 0.0
      %243 = vmatpush1.msra.mxu0 %v189
      %244 = vmatprep.subr.mxu0 0.0
      %245 = vmatpush1.msra.mxu0 %v190
      %246 = vmatprep.subr.mxu0 0.0
      %247 = vmatpush1.msra.mxu0 %v191
      %248 = vmatprep.subr.mxu0 0.0
      %249 = vmatpush1.msra.mxu0 %v192
      %250 = vmatprep.subr.mxu0 0.0
      %251 = vmatpush1.msra.mxu0 %v193
      %252 = vmatprep.subr.mxu0 0.0
      %253 = vmatpush1.msra.mxu0 %v194
      %254 = vmatprep.subr.mxu0 0.0
      %255 = vmatpush1.msra.mxu0 %v195
      %256 = vmatprep.subr.mxu0 0.0
      %257 = vmatpush1.msra.mxu0 %v196
      %258 = vmatprep.subr.mxu0 0.0
      %259 = vmatpush1.msra.mxu0 %v197
      %260 = vmatprep.subr.mxu0 0.0
      %261 = vmatpush1.msra.mxu0 %v198
      %262 = vmatprep.subr.mxu0 0.0
      %263 = vmatpush1.msra.mxu0 %v199
      %264 = vmatprep.subr.mxu0 0.0
      %265 = vmatpush1.msra.mxu0 %v200
      %266 = vmatprep.subr.mxu0 0.0
      %267 = vmatpush1.msra.mxu0 %v201
      %268 = vmatprep.subr.mxu0 0.0
      %269 = vmatpush1.msra.mxu0 %v202
      %270 = vmatprep.subr.mxu0 0.0
      %271 = vmatpush1.msra.mxu0 %v203
      %272 = vmatprep.subr.mxu0 0.0
      %273 = vmatpush1.msra.mxu0 %v204
      %274 = vmatprep.subr.mxu0 0.0
      %275 = vmatpush1.msra.mxu0 %v205
      %276 = vmatprep.subr.mxu0 0.0
      %277 = vmatpush1.msra.mxu0 %v206
      %278 = vmatprep.subr.mxu0 0.0
      %279 = vmatpush1.msra.mxu0 %v207
      %280 = vmatprep.subr.mxu0 0.0
      %281 = vmatpush1.msra.mxu0 %v208
      %282 = vmatprep.subr.mxu0 0.0
      %283 = vmatpush1.msra.mxu0 %v209
      %284 = vmatprep.subr.mxu0 0.0
      %285 = vmatpush1.msra.mxu0 %v210
      %286 = vmatprep.subr.mxu0 0.0
      %287 = vmatpush1.msra.mxu0 %v211
      %288 = vmatprep.subr.mxu0 0.0
      %289 = vmatpush1.msra.mxu0 0.0
      %290 = vmatprep.subr.mxu0 0.0
      %291 = vmatpush1.msra.mxu0 0.0
      %292 = vmatprep.subr.mxu0 0.0
      %293 = vmatpush1.msra.mxu0 0.0
      %294 = vmatprep.subr.mxu0 0.0
      %295 = vmatpush1.msra.mxu0 0.0
      %296 = vmatprep.subr.mxu0 0.0
      %297 = vmatpush1.msra.mxu0 0.0
      %298 = vmatprep.mubr.f32.mxu0 %v214
      %299 = vmatmul.mubr.f32.gmra.mrb[0].mxu0 %v171
      %v300 = vpop.f32.mrb[0].mxu0
      %v301 = vadd.f32 0.0, %v300
      %v302 = vpop.f32.mrb[0].mxu0
      %303 = vmatprep.mubr.f32.mxu0 %v217
      %304 = vmatmul.mubr.f32.gmra.mrb[0].mxu0 %v173
      %v305 = vpop.f32.mrb[0].mxu0
      %v306 = vadd.f32 0.0, %v305
      %v307 = vpop.f32.mrb[0].mxu0
      %308 = vmatprep.mubr.f32.mxu0 %v220
      %309 = vmatmul.mubr.f32.gmra.mrb[0].mxu0 %v175
      %v310 = vpop.f32.mrb[0].mxu0
      %v311 = vadd.f32 0.0, %v310
      %v312 = vpop.f32.mrb[0].mxu0
      %313 = vmatprep.mubr.f32.mxu0 %v223
      %314 = vmatmul.mubr.f32.gmra.mrb[0].mxu0 %v177
      %v315 = vpop.f32.mrb[0].mxu0
      %v316 = vadd.f32 0.0, %v315
      %v317 = vpop.f32.mrb[0].mxu0
      %318 = vmatprep.mubr.f32.mxu0 %v226
      %319 = vmatmul.mubr.f32.gmra.mrb[0].mxu0 %v179
      %v320 = vpop.f32.mrb[0].mxu0
      %v321 = vadd.f32 0.0, %v320
      %v322 = vpop.f32.mrb[0].mxu0
      %323 = vmatprep.mubr.f32.mxu0 %v229
      %324 = vmatmul.mubr.f32.gmra.mrb[0].mxu0 %v181
      %v325 = vpop.f32.mrb[0].mxu0
      %v326 = vadd.f32 0.0, %v325
      %v327 = vpop.f32.mrb[0].mxu0
      %328 = vmatprep.mubr.f32.mxu0 %v232
      %329 = vmatmul.mubr.f32.gmra.mrb[0].mxu0 %v183
      %v330 = vpop.f32.mrb[0].mxu0
      %v331 = vadd.f32 0.0, %v330
      %v332 = vpop.f32.mrb[0].mxu0
      %333 = vdwg.mxu0
      %334 = vst [vmem:[#allocation2] sm:$0x1f] 0.0
      %335 = vst [vmem:[#allocation2 + $0x8] sm:$0x1f] 0.0
      %336 = vst [vmem:[#allocation2 + $0x10] sm:$0x1f] 0.0
      %337 = vst [vmem:[#allocation2 + $0x18] sm:$0x1f] 0.0
      %338 = vst [vmem:[#allocation2 + $0x20] sm:$0x1f] 0.0
      %339 = vst [vmem:[#allocation2 + $0x28] sm:$0x1f] 0.0
      %340 = vst [vmem:[#allocation2 + $0x30] sm:$0x1f] 0.0
      %341 = vst [vmem:[#allocation2 + $0x38] sm:$0x1f] 0.0
      %342 = vst [vmem:[#allocation2 + $0x40] sm:$0x1f] 0.0
      %343 = vst [vmem:[#allocation2 + $0x48] sm:$0x1f] 0.0
      %344 = vst [vmem:[#allocation2 + $0x50] sm:$0x1f] 0.0
      %345 = vst [vmem:[#allocation2 + $0x58] sm:$0x1f] 0.0
      %346 = vst [vmem:[#allocation2 + $0x60] sm:$0x1f] 0.0
      %347 = vst [vmem:[#allocation2 + $0x68] sm:$0x1f] 0.0
      %348 = vst [vmem:[#allocation2 + $0x70] sm:$0x1f] 0.0
      %349 = vst [vmem:[#allocation2 + $0x78] sm:$0x1f] 0.0
      %350 = vst [vmem:[#allocation2 + $0x80] sm:$0x1f] 0.0
      %351 = vst [vmem:[#allocation2 + $0x88] sm:$0x1f] 0.0
      %352 = vst [vmem:[#allocation2 + $0x90] sm:$0x1f] 0.0
      %353 = vst [vmem:[#allocation2 + $0x98] sm:$0x1f] 0.0
      %s354 = scalar_lea.vmem [#allocation2], 8
      %355 = vst [vmem:[%s354 + $0x1] sm:$0xf] %v301
      %s356 = scalar_lea.vmem [#allocation2], 16
      %357 = vst [vmem:[%s356 - $0x3] sm:$0xf0] %v301
      %s358 = scalar_lea.vmem [#allocation2], 24
      %359 = vst [vmem:[%s358 + $0x1] sm:$0xf] %v306
      %s360 = scalar_lea.vmem [#allocation2], 48
      %361 = vst [vmem:[%s360 - $0x4] sm:$0xf0] %v306
      %s362 = scalar_lea.vmem [#allocation2], 56
      %363 = vst [vmem:[%s362] sm:$0xf] %v311
      %s364 = scalar_lea.vmem [#allocation2], 64
      %365 = vst [vmem:[%s364 - $0x4] sm:$0xf0] %v311
      %s366 = scalar_lea.vmem [#allocation2], 80
      %367 = vst [vmem:[%s366 + $0x1] sm:$0xf] %v316
      %s368 = scalar_lea.vmem [#allocation2], 88
      %369 = vst [vmem:[%s368 - $0x3] sm:$0xf0] %v316
      %s370 = scalar_lea.vmem [#allocation2], 96
      %371 = vst [vmem:[%s370 + $0x1] sm:$0xf] %v321
      %s372 = scalar_lea.vmem [#allocation2], 104
      %373 = vst [vmem:[%s372 - $0x3] sm:$0xf0] %v321
      %s374 = scalar_lea.vmem [#allocation2], 120
      %375 = vst [vmem:[%s374] sm:$0xf] %v326
      %s376 = scalar_lea.vmem [#allocation2], 128
      %377 = vst [vmem:[%s376 - $0x4] sm:$0xf0] %v326
      %s378 = scalar_lea.vmem [#allocation2], 136
      %379 = vst [vmem:[%s378] sm:$0xf] %v331
      %s380 = scalar_lea.vmem [#allocation2], 144
      %381 = vst [vmem:[%s380 - $0x4] sm:$0xf0] %v331
      %v382 = vld [vmem:[#allocation2] sm:$0xf]
      %383 = vst [vmem:[#allocation3] sm:$0xf] %v382
      %v384 = vld [vmem:[%s354] sm:$0xf]
      %v386 = vrot.slane %v384, 4
      %388 = vst [vmem:[#allocation3] sm:$0xf0] %v386
      %v389 = vld [vmem:[%s356] sm:$0xf]
      %390 = vst [vmem:[#allocation3 + $0x48] sm:$0xf] %v389
      %v391 = vld [vmem:[%s358] sm:$0xf]
      %v393 = vrot.slane %v391, 4
      %395 = vst [vmem:[#allocation3 + $0x48] sm:$0xf0] %v393
      %s396 = scalar_lea.vmem [#allocation2], 40
      %v397 = vld [vmem:[%s396] sm:$0xf]
      %398 = vst [vmem:[#allocation3 + $0x8] sm:$0xf] %v397
      %v399 = vld [vmem:[%s360] sm:$0xf]
      %v401 = vrot.slane %v399, 4
      %403 = vst [vmem:[#allocation3 + $0x8] sm:$0xf0] %v401
      %v404 = vld [vmem:[%s362] sm:$0xf]
      %405 = vst [vmem:[#allocation3 + $0x50] sm:$0xf] %v404
      %v406 = vld [vmem:[%s364] sm:$0xf]
      %v408 = vrot.slane %v406, 4
      %410 = vst [vmem:[#allocation3 + $0x50] sm:$0xf0] %v408
      %v411 = vld [vmem:[#allocation2 + $0x1] sm:$0xf]
      %412 = vst [vmem:[#allocation3 + $0x10] sm:$0xf] %v411
      %v413 = vld [vmem:[%s354 + $0x1] sm:$0xf]
      %v415 = vrot.slane %v413, 4
      %417 = vst [vmem:[#allocation3 + $0x10] sm:$0xf0] %v415
      %v418 = vld [vmem:[%s356 + $0x1] sm:$0xf]
      %419 = vst [vmem:[#allocation3 + $0x58] sm:$0xf] %v418
      %v420 = vld [vmem:[%s358 + $0x1] sm:$0xf]
      %v422 = vrot.slane %v420, 4
      %424 = vst [vmem:[#allocation3 + $0x58] sm:$0xf0] %v422
      %v425 = vld [vmem:[%s366] sm:$0xf]
      %426 = vst [vmem:[#allocation3 + $0x18] sm:$0xf] %v425
      %v427 = vld [vmem:[%s368] sm:$0xf]
      %v429 = vrot.slane %v427, 4
      %431 = vst [vmem:[#allocation3 + $0x18] sm:$0xf0] %v429
      %v432 = vld [vmem:[%s370] sm:$0xf]
      %433 = vst [vmem:[#allocation3 + $0x60] sm:$0xf] %v432
      %v434 = vld [vmem:[%s372] sm:$0xf]
      %v436 = vrot.slane %v434, 4
      %438 = vst [vmem:[#allocation3 + $0x60] sm:$0xf0] %v436
      %v439 = vld [vmem:[%s374] sm:$0xf]
      %440 = vst [vmem:[#allocation3 + $0x20] sm:$0xf] %v439
      %v441 = vld [vmem:[%s376] sm:$0xf]
      %v443 = vrot.slane %v441, 4
      %445 = vst [vmem:[#allocation3 + $0x20] sm:$0xf0] %v443
      %v446 = vld [vmem:[%s378] sm:$0xf]
      %447 = vst [vmem:[#allocation3 + $0x68] sm:$0xf] %v446
      %v448 = vld [vmem:[%s380] sm:$0xf]
      %v450 = vrot.slane %v448, 4
      %452 = vst [vmem:[#allocation3 + $0x68] sm:$0xf0] %v450
      %v453 = vld [vmem:[%s366 + $0x1] sm:$0xf]
      %454 = vst [vmem:[#allocation3 + $0x28] sm:$0xf] %v453
      %v455 = vld [vmem:[%s368 + $0x1] sm:$0xf]
      %v457 = vrot.slane %v455, 4
      %459 = vst [vmem:[#allocation3 + $0x28] sm:$0xf0] %v457
      %v460 = vld [vmem:[%s370 + $0x1] sm:$0xf]
      %461 = vst [vmem:[#allocation3 + $0x70] sm:$0xf] %v460
      %v462 = vld [vmem:[%s372 + $0x1] sm:$0xf]
      %v464 = vrot.slane %v462, 4
      %466 = vst [vmem:[#allocation3 + $0x70] sm:$0xf0] %v464
      %v467 = vld [vmem:[%s354] sm:$0xf]
      %468 = vst [vmem:[#allocation3 + $0x30] sm:$0xf] %v467
      %v469 = vld [vmem:[%s356] sm:$0xf]
      %v471 = vrot.slane %v469, 4
      %473 = vst [vmem:[#allocation3 + $0x30] sm:$0xf0] %v471
      %v474 = vld [vmem:[%s358] sm:$0xf]
      %475 = vst [vmem:[#allocation3 + $0x78] sm:$0xf] %v474
      %s476 = scalar_lea.vmem [#allocation2], 32
      %v477 = vld [vmem:[%s476] sm:$0xf]
      %v479 = vrot.slane %v477, 4
      %481 = vst [vmem:[#allocation3 + $0x78] sm:$0xf0] %v479
      %v482 = vld [vmem:[%s360] sm:$0xf]
      %483 = vst [vmem:[#allocation3 + $0x38] sm:$0xf] %v482
      %v484 = vld [vmem:[%s362] sm:$0xf]
      %v486 = vrot.slane %v484, 4
      %488 = vst [vmem:[#allocation3 + $0x38] sm:$0xf0] %v486
      %v489 = vld [vmem:[%s364] sm:$0xf]
      %490 = vst [vmem:[#allocation3 + $0x80] sm:$0xf] %v489
      %s491 = scalar_lea.vmem [#allocation2], 72
      %v492 = vld [vmem:[%s491] sm:$0xf]
      %v494 = vrot.slane %v492, 4
      %496 = vst [vmem:[#allocation3 + $0x80] sm:$0xf0] %v494
      %v497 = vld [vmem:[%s354 + $0x1] sm:$0xf]
      %498 = vst [vmem:[#allocation3 + $0x40] sm:$0xf] %v497
      %v499 = vld [vmem:[%s356 + $0x1] sm:$0xf]
      %v501 = vrot.slane %v499, 4
      %503 = vst [vmem:[#allocation3 + $0x40] sm:$0xf0] %v501
      %v504 = vld [vmem:[%s358 + $0x1] sm:$0xf]
      %505 = vst [vmem:[#allocation3 + $0x88] sm:$0xf] %v504
      %v506 = vld [vmem:[%s476 + $0x1] sm:$0xf]
      %v508 = vrot.slane %v506, 4
      %510 = vst [vmem:[#allocation3 + $0x88] sm:$0xf0] %v508
      %v511 = vld [vmem:[#allocation3] sm:$0xff]
      %v512 = vld [vmem:[#allocation3 + $0x8] sm:$0xff]
      %v513 = vld [vmem:[#allocation3 + $0x10] sm:$0xff]
      %v514 = vld [vmem:[#allocation3 + $0x18] sm:$0xff]
      %v515 = vld [vmem:[#allocation3 + $0x20] sm:$0xff]
      %v516 = vld [vmem:[#allocation3 + $0x28] sm:$0xff]
      %v517 = vld [vmem:[#allocation3 + $0x30] sm:$0xff]
      %v518 = vld [vmem:[#allocation3 + $0x38] sm:$0xff]
      %v519 = vld [vmem:[#allocation3 + $0x40] sm:$0xff]
      %v520 = vld [vmem:[#allocation3 + $0x48] sm:$0xff]
      %v521 = vld [vmem:[#allocation3 + $0x50] sm:$0xff]
      %v522 = vld [vmem:[#allocation3 + $0x58] sm:$0xff]
      %v523 = vld [vmem:[#allocation3 + $0x60] sm:$0xff]
      %v524 = vld [vmem:[#allocation3 + $0x68] sm:$0xff]
      %v525 = vld [vmem:[#allocation3 + $0x70] sm:$0xff]
      %v526 = vld [vmem:[#allocation3 + $0x78] sm:$0xff]
      %v527 = vld [vmem:[#allocation3 + $0x80] sm:$0xff]
      %v528 = vld [vmem:[#allocation3 + $0x88] sm:$0xff]
      %v529 = vld [vmem:[%s2] sm:$0xff]
      %v530 = vld [vmem:[%s2 + $0x8] sm:$0xff]
      %v531 = vld [vmem:[%s2 + $0x10] sm:$0xff]
      %v532 = vld [vmem:[%s2 + $0x18] sm:$0xff]
      %v533 = vld [vmem:[%s2 + $0x20] sm:$0xff]
      %v534 = vld [vmem:[%s2 + $0x28] sm:$0xff]
      %v535 = vld [vmem:[%s2 + $0x30] sm:$0xff]
      %v536 = vld [vmem:[%s2 + $0x38] sm:$0xff]
      %v537 = vld [vmem:[%s2 + $0x40] sm:$0xff]
      %v538 = vld [vmem:[%s2 + $0x48] sm:$0xff]
      %v539 = vld [vmem:[%s2 + $0x50] sm:$0xff]
      %v540 = vld [vmem:[%s2 + $0x58] sm:$0xff]
      %v541 = vld [vmem:[%s2 + $0x60] sm:$0xff]
      %v542 = vld [vmem:[%s2 + $0x68] sm:$0xff]
      %v543 = vld [vmem:[%s2 + $0x70] sm:$0xff]
      %v544 = vld [vmem:[%s2 + $0x78] sm:$0xff]
      %v545 = vld [vmem:[%s2 + $0x80] sm:$0xff]
      %v546 = vld [vmem:[%s2 + $0x88] sm:$0xff]
      %v547 = vld [vmem:[%s2 + $0x90] sm:$0xff]
      %v548 = vld [vmem:[%s2 + $0x98] sm:$0xff]
      %v549 = vld [vmem:[%s2 + $0xa0] sm:$0xff]
      %v550 = vld [vmem:[%s2 + $0xa8] sm:$0xff]
      %v551 = vld [vmem:[%s2 + $0xb0] sm:$0xff]
      %v552 = vld [vmem:[%s2 + $0xb8] sm:$0xff]
      %v553 = vld [vmem:[%s2 + $0xc0] sm:$0xff]
      %v554 = vld [vmem:[%s2 + $0xc8] sm:$0xff]
      %v555 = vld [vmem:[%s2 + $0xd0] sm:$0xff]
      %v556 = vld [vmem:[%s2 + $0xd8] sm:$0xff]
      %v557 = vld [vmem:[%s2 + $0xe0] sm:$0xff]
      %v558 = vld [vmem:[%s2 + $0xe8] sm:$0xff]
      %v559 = vld [vmem:[%s2 + $0xf0] sm:$0xff]
      %v560 = vld [vmem:[%s2 + $0xf8] sm:$0xff]
      %v561 = vld [vmem:[%s2 + $0x100] sm:$0xff]
      %v562 = vld [vmem:[%s2 + $0x108] sm:$0xff]
      %v563 = vld [vmem:[%s2 + $0x110] sm:$0xff]
      %v564 = vld [vmem:[%s2 + $0x118] sm:$0xff]
      %v565 = vld [vmem:[%s2 + $0x120] sm:$0xff]
      %v566 = vld [vmem:[%s2 + $0x128] sm:$0xff]
      %v567 = vld [vmem:[%s2 + $0x130] sm:$0xff]
      %v568 = vld [vmem:[%s2 + $0x138] sm:$0xff]
      %v569 = vld [vmem:[%s2 + $0x140] sm:$0xff]
      %v570 = vld [vmem:[%s2 + $0x148] sm:$0xff]
      %v571 = vld [vmem:[%s2 + $0x150] sm:$0xff]
      %v572 = vld [vmem:[%s2 + $0x158] sm:$0xff]
      %v573 = vld [vmem:[%s2 + $0x160] sm:$0xff]
      %v574 = vld [vmem:[%s2 + $0x168] sm:$0xff]
      %v575 = vld [vmem:[%s2 + $0x170] sm:$0xff]
      %v576 = vld [vmem:[%s2 + $0x178] sm:$0xff]
      %v577 = vld [vmem:[%s2 + $0x180] sm:$0xff]
      %v578 = vld [vmem:[%s2 + $0x188] sm:$0xff]
      %v579 = vld [vmem:[%s2 + $0x190] sm:$0xff]
      %v580 = vld [vmem:[%s2 + $0x198] sm:$0xff]
      %v581 = vld [vmem:[%s2 + $0x1a0] sm:$0xff]
      %v582 = vld [vmem:[%s2 + $0x1a8] sm:$0xff]
      %v583 = vld [vmem:[%s2 + $0x1b0] sm:$0xff]
      %v584 = vld [vmem:[%s2 + $0x1b8] sm:$0xff]
      %v585 = vld [vmem:[%s2 + $0x1c0] sm:$0xff]
      %v586 = vld [vmem:[%s2 + $0x1c8] sm:$0xff]
      %v587 = vld [vmem:[%s2 + $0x1d0] sm:$0xff]
      %v588 = vld [vmem:[%s2 + $0x1d8] sm:$0xff]
      %v589 = vld [vmem:[%s2 + $0x1e0] sm:$0xff]
      %v590 = vld [vmem:[%s2 + $0x1e8] sm:$0xff]
      %v591 = vld [vmem:[%s2 + $0x1f0] sm:$0xff]
      %v592 = vld [vmem:[%s2 + $0x1f8] sm:$0xff]
      %v593 = vld [vmem:[%s2 + $0x200] sm:$0xff]
      %v594 = vld [vmem:[%s2 + $0x208] sm:$0xff]
      %v595 = vld [vmem:[%s2 + $0x210] sm:$0xff]
      %v596 = vld [vmem:[%s2 + $0x218] sm:$0xff]
      %v597 = vld [vmem:[%s2 + $0x220] sm:$0xff]
      %v598 = vld [vmem:[%s2 + $0x228] sm:$0xff]
      %v599 = vld [vmem:[%s2 + $0x230] sm:$0xff]
      %v600 = vld [vmem:[%s2 + $0x238] sm:$0xff]
      %v601 = vld [vmem:[%s2 + $0x240] sm:$0xff]
      %v602 = vld [vmem:[%s2 + $0x248] sm:$0xff]
      %v603 = vld [vmem:[%s2 + $0x250] sm:$0xff]
      %v604 = vld [vmem:[%s2 + $0x258] sm:$0xff]
      %v605 = vld [vmem:[%s2 + $0x260] sm:$0xff]
      %v606 = vld [vmem:[%s2 + $0x268] sm:$0xff]
      %v607 = vld [vmem:[%s2 + $0x270] sm:$0xff]
      %v608 = vld [vmem:[%s2 + $0x278] sm:$0xff]
      %v609 = vld [vmem:[%s2 + $0x280] sm:$0xff]
      %v610 = vld [vmem:[%s2 + $0x288] sm:$0xff]
      %v611 = vld [vmem:[%s2 + $0x290] sm:$0xff]
      %v612 = vld [vmem:[%s2 + $0x298] sm:$0xff]
      %v613 = vld [vmem:[%s2 + $0x2a0] sm:$0xff]
      %v614 = vld [vmem:[%s2 + $0x2a8] sm:$0xff]
      %v615 = vld [vmem:[%s2 + $0x2b0] sm:$0xff]
      %v616 = vld [vmem:[%s2 + $0x2b8] sm:$0xff]
      %v617 = vld [vmem:[%s2 + $0x2c0] sm:$0xff]
      %v618 = vld [vmem:[%s2 + $0x2c8] sm:$0xff]
      %v619 = vld [vmem:[%s2 + $0x2d0] sm:$0xff]
      %v620 = vld [vmem:[%s2 + $0x2d8] sm:$0xff]
      %v621 = vld [vmem:[%s2 + $0x2e0] sm:$0xff]
      %v622 = vld [vmem:[%s2 + $0x2e8] sm:$0xff]
      %v623 = vld [vmem:[%s2 + $0x2f0] sm:$0xff]
      %v624 = vld [vmem:[%s2 + $0x2f8] sm:$0xff]
      %v625 = vld [vmem:[%s2 + $0x300] sm:$0xff]
      %v626 = vld [vmem:[%s2 + $0x308] sm:$0xff]
      %v627 = vld [vmem:[%s2 + $0x310] sm:$0xff]
      %v628 = vld [vmem:[%s2 + $0x318] sm:$0xff]
      %v629 = vld [vmem:[%s2 + $0x320] sm:$0xff]
      %v630 = vld [vmem:[%s2 + $0x328] sm:$0xff]
      %v631 = vld [vmem:[%s2 + $0x330] sm:$0xff]
      %v632 = vld [vmem:[%s2 + $0x338] sm:$0xff]
      %v633 = vld [vmem:[%s2 + $0x340] sm:$0xff]
      %v634 = vld [vmem:[%s2 + $0x348] sm:$0xff]
      %v635 = vld [vmem:[%s2 + $0x350] sm:$0xff]
      %v636 = vld [vmem:[%s2 + $0x358] sm:$0xff]
      %v637 = vld [vmem:[%s2 + $0x360] sm:$0xff]
      %v638 = vld [vmem:[%s2 + $0x368] sm:$0xff]
      %v639 = vld [vmem:[%s2 + $0x370] sm:$0xff]
      %v640 = vld [vmem:[%s2 + $0x378] sm:$0xff]
      %v641 = vld [vmem:[%s2 + $0x380] sm:$0xff]
      %v642 = vld [vmem:[%s2 + $0x388] sm:$0xff]
      %v643 = vld [vmem:[%s2 + $0x390] sm:$0xff]
      %v644 = vld [vmem:[%s2 + $0x398] sm:$0xff]
      %v645 = vld [vmem:[%s2 + $0x3a0] sm:$0xff]
      %v646 = vld [vmem:[%s2 + $0x3a8] sm:$0xff]
      %v647 = vld [vmem:[%s2 + $0x3b0] sm:$0xff]
      %v648 = vld [vmem:[%s2 + $0x3b8] sm:$0xff]
      %v649 = vld [vmem:[%s2 + $0x3c0] sm:$0xff]
      %v650 = vld [vmem:[%s2 + $0x3c8] sm:$0xff]
      %v651 = vld [vmem:[%s2 + $0x3d0] sm:$0xff]
      %v652 = vld [vmem:[%s2 + $0x3d8] sm:$0xff]
      %v653 = vld [vmem:[%s2 + $0x3e0] sm:$0xff]
      %v654 = vld [vmem:[%s2 + $0x3e8] sm:$0xff]
      %v655 = vld [vmem:[%s2 + $0x3f0] sm:$0xff]
      %v656 = vld [vmem:[%s2 + $0x3f8] sm:$0xff]
      %v657 = vld [vmem:[%s2 + $0x400] sm:$0xff]
      %v658 = vld [vmem:[%s2 + $0x408] sm:$0xff]
      %v659 = vld [vmem:[%s2 + $0x410] sm:$0xff]
      %v660 = vld [vmem:[%s2 + $0x418] sm:$0xff]
      %v661 = vld [vmem:[%s2 + $0x420] sm:$0xff]
      %v662 = vld [vmem:[%s2 + $0x428] sm:$0xff]
      %v663 = vld [vmem:[%s2 + $0x430] sm:$0xff]
      %v664 = vld [vmem:[%s2 + $0x438] sm:$0xff]
      %v665 = vld [vmem:[%s2 + $0x440] sm:$0xff]
      %v666 = vld [vmem:[%s2 + $0x448] sm:$0xff]
      %v667 = vld [vmem:[%s2 + $0x450] sm:$0xff]
      %v668 = vld [vmem:[%s2 + $0x458] sm:$0xff]
      %v669 = vld [vmem:[%s2 + $0x460] sm:$0xff]
      %v670 = vld [vmem:[%s2 + $0x468] sm:$0xff]
      %v671 = vld [vmem:[%s2 + $0x470] sm:$0xff]
      %v672 = vld [vmem:[%s2 + $0x478] sm:$0xff]
      %673 = vmatprep.subr.mxu0 0.0
      %674 = vmatpush1.msra.mxu0 %v529
      %675 = vmatprep.subr.mxu0 0.0
      %676 = vmatpush1.msra.mxu0 %v530
      %677 = vmatprep.subr.mxu0 0.0
      %678 = vmatpush1.msra.mxu0 %v531
      %679 = vmatprep.subr.mxu0 0.0
      %680 = vmatpush1.msra.mxu0 %v532
      %681 = vmatprep.subr.mxu0 0.0
      %682 = vmatpush1.msra.mxu0 %v533
      %683 = vmatprep.subr.mxu0 0.0
      %684 = vmatpush1.msra.mxu0 %v534
      %685 = vmatprep.subr.mxu0 0.0
      %686 = vmatpush1.msra.mxu0 %v535
      %687 = vmatprep.subr.mxu0 0.0
      %688 = vmatpush1.msra.mxu0 %v536
      %689 = vmatprep.subr.mxu0 0.0
      %690 = vmatpush1.msra.mxu0 %v537
      %691 = vmatprep.subr.mxu0 0.0
      %692 = vmatpush1.msra.mxu0 %v538
      %693 = vmatprep.subr.mxu0 0.0
      %694 = vmatpush1.msra.mxu0 %v539
      %695 = vmatprep.subr.mxu0 0.0
      %696 = vmatpush1.msra.mxu0 %v540
      %697 = vmatprep.subr.mxu0 0.0
      %698 = vmatpush1.msra.mxu0 %v541
      %699 = vmatprep.subr.mxu0 0.0
      %700 = vmatpush1.msra.mxu0 %v542
      %701 = vmatprep.subr.mxu0 0.0
      %702 = vmatpush1.msra.mxu0 %v543
      %703 = vmatprep.subr.mxu0 0.0
      %704 = vmatpush1.msra.mxu0 %v544
      %705 = vmatprep.subr.mxu0 0.0
      %706 = vmatpush1.msra.mxu0 %v545
      %707 = vmatprep.subr.mxu0 0.0
      %708 = vmatpush1.msra.mxu0 %v546
      %709 = vmatprep.subr.mxu0 0.0
      %710 = vmatpush1.msra.mxu0 %v547
      %711 = vmatprep.subr.mxu0 0.0
      %712 = vmatpush1.msra.mxu0 %v548
      %713 = vmatprep.subr.mxu0 0.0
      %714 = vmatpush1.msra.mxu0 %v549
      %715 = vmatprep.subr.mxu0 0.0
      %716 = vmatpush1.msra.mxu0 %v550
      %717 = vmatprep.subr.mxu0 0.0
      %718 = vmatpush1.msra.mxu0 %v551
      %719 = vmatprep.subr.mxu0 0.0
      %720 = vmatpush1.msra.mxu0 %v552
      %721 = vmatprep.subr.mxu0 0.0
      %722 = vmatpush1.msra.mxu0 %v553
      %723 = vmatprep.subr.mxu0 0.0
      %724 = vmatpush1.msra.mxu0 %v554
      %725 = vmatprep.subr.mxu0 0.0
      %726 = vmatpush1.msra.mxu0 %v555
      %727 = vmatprep.subr.mxu0 0.0
      %728 = vmatpush1.msra.mxu0 %v556
      %729 = vmatprep.subr.mxu0 0.0
      %730 = vmatpush1.msra.mxu0 %v557
      %731 = vmatprep.subr.mxu0 0.0
      %732 = vmatpush1.msra.mxu0 %v558
      %733 = vmatprep.subr.mxu0 0.0
      %734 = vmatpush1.msra.mxu0 %v559
      %735 = vmatprep.subr.mxu0 0.0
      %736 = vmatpush1.msra.mxu0 %v560
      %737 = vmatprep.mubr.f32.mxu0 %v512
      %738 = vmatmul.mubr.f32.gmra.mrb[0].mxu0 %v511
      %v739 = vpop.f32.mrb[0].mxu0
      %v740 = vadd.f32 0.0, %v739
      %v741 = vpop.f32.mrb[0].mxu0
      %742 = vmatprep.mubr.f32.mxu0 %v521
      %743 = vmatmul.mubr.f32.gmra.mrb[0].mxu0 %v520
      %v744 = vpop.f32.mrb[0].mxu0
      %v745 = vadd.f32 0.0, %v744
      %v746 = vpop.f32.mrb[0].mxu0
      %747 = vdwg.mxu0
      %748 = vmatprep.subr.mxu0 0.0
      %749 = vmatpush1.msra.mxu0 %v561
      %750 = vmatprep.subr.mxu0 0.0
      %751 = vmatpush1.msra.mxu0 %v562
      %752 = vmatprep.subr.mxu0 0.0
      %753 = vmatpush1.msra.mxu0 %v563
      %754 = vmatprep.subr.mxu0 0.0
      %755 = vmatpush1.msra.mxu0 %v564
      %756 = vmatprep.subr.mxu0 0.0
      %757 = vmatpush1.msra.mxu0 %v565
      %758 = vmatprep.subr.mxu0 0.0
      %759 = vmatpush1.msra.mxu0 %v566
      %760 = vmatprep.subr.mxu0 0.0
      %761 = vmatpush1.msra.mxu0 %v567
      %762 = vmatprep.subr.mxu0 0.0
      %763 = vmatpush1.msra.mxu0 %v568
      %764 = vmatprep.subr.mxu0 0.0
      %765 = vmatpush1.msra.mxu0 %v569
      %766 = vmatprep.subr.mxu0 0.0
      %767 = vmatpush1.msra.mxu0 %v570
      %768 = vmatprep.subr.mxu0 0.0
      %769 = vmatpush1.msra.mxu0 %v571
      %770 = vmatprep.subr.mxu0 0.0
      %771 = vmatpush1.msra.mxu0 %v572
      %772 = vmatprep.subr.mxu0 0.0
      %773 = vmatpush1.msra.mxu0 %v573
      %774 = vmatprep.subr.mxu0 0.0
      %775 = vmatpush1.msra.mxu0 %v574
      %776 = vmatprep.subr.mxu0 0.0
      %777 = vmatpush1.msra.mxu0 %v575
      %778 = vmatprep.subr.mxu0 0.0
      %779 = vmatpush1.msra.mxu0 %v576
      %780 = vmatprep.subr.mxu0 0.0
      %781 = vmatpush1.msra.mxu0 %v577
      %782 = vmatprep.subr.mxu0 0.0
      %783 = vmatpush1.msra.mxu0 %v578
      %784 = vmatprep.subr.mxu0 0.0
      %785 = vmatpush1.msra.mxu0 %v579
      %786 = vmatprep.subr.mxu0 0.0
      %787 = vmatpush1.msra.mxu0 %v580
      %788 = vmatprep.subr.mxu0 0.0
      %789 = vmatpush1.msra.mxu0 %v581
      %790 = vmatprep.subr.mxu0 0.0
      %791 = vmatpush1.msra.mxu0 %v582
      %792 = vmatprep.subr.mxu0 0.0
      %793 = vmatpush1.msra.mxu0 %v583
      %794 = vmatprep.subr.mxu0 0.0
      %795 = vmatpush1.msra.mxu0 %v584
      %796 = vmatprep.subr.mxu0 0.0
      %797 = vmatpush1.msra.mxu0 %v585
      %798 = vmatprep.subr.mxu0 0.0
      %799 = vmatpush1.msra.mxu0 %v586
      %800 = vmatprep.subr.mxu0 0.0
      %801 = vmatpush1.msra.mxu0 %v587
      %802 = vmatprep.subr.mxu0 0.0
      %803 = vmatpush1.msra.mxu0 %v588
      %804 = vmatprep.subr.mxu0 0.0
      %805 = vmatpush1.msra.mxu0 %v589
      %806 = vmatprep.subr.mxu0 0.0
      %807 = vmatpush1.msra.mxu0 %v590
      %808 = vmatprep.subr.mxu0 0.0
      %809 = vmatpush1.msra.mxu0 %v591
      %810 = vmatprep.subr.mxu0 0.0
      %811 = vmatpush1.msra.mxu0 %v592
      %812 = vmatprep.mubr.f32.mxu0 %v514
      %813 = vmatmul.mubr.f32.gmra.mrb[0].mxu0 %v513
      %v814 = vpop.f32.mrb[0].mxu0
      %v815 = vadd.f32 %v740, %v814
      %v816 = vpop.f32.mrb[0].mxu0
      %817 = vmatprep.mubr.f32.mxu0 %v523
      %818 = vmatmul.mubr.f32.gmra.mrb[0].mxu0 %v522
      %v819 = vpop.f32.mrb[0].mxu0
      %v820 = vadd.f32 %v745, %v819
      %v821 = vpop.f32.mrb[0].mxu0
      %822 = vdwg.mxu0
      %823 = vmatprep.subr.mxu0 0.0
      %824 = vmatpush1.msra.mxu0 %v593
      %825 = vmatprep.subr.mxu0 0.0
      %826 = vmatpush1.msra.mxu0 %v594
      %827 = vmatprep.subr.mxu0 0.0
      %828 = vmatpush1.msra.mxu0 %v595
      %829 = vmatprep.subr.mxu0 0.0
      %830 = vmatpush1.msra.mxu0 %v596
      %831 = vmatprep.subr.mxu0 0.0
      %832 = vmatpush1.msra.mxu0 %v597
      %833 = vmatprep.subr.mxu0 0.0
      %834 = vmatpush1.msra.mxu0 %v598
      %835 = vmatprep.subr.mxu0 0.0
      %836 = vmatpush1.msra.mxu0 %v599
      %837 = vmatprep.subr.mxu0 0.0
      %838 = vmatpush1.msra.mxu0 %v600
      %839 = vmatprep.subr.mxu0 0.0
      %840 = vmatpush1.msra.mxu0 %v601
      %841 = vmatprep.subr.mxu0 0.0
      %842 = vmatpush1.msra.mxu0 %v602
      %843 = vmatprep.subr.mxu0 0.0
      %844 = vmatpush1.msra.mxu0 %v603
      %845 = vmatprep.subr.mxu0 0.0
      %846 = vmatpush1.msra.mxu0 %v604
      %847 = vmatprep.subr.mxu0 0.0
      %848 = vmatpush1.msra.mxu0 %v605
      %849 = vmatprep.subr.mxu0 0.0
      %850 = vmatpush1.msra.mxu0 %v606
      %851 = vmatprep.subr.mxu0 0.0
      %852 = vmatpush1.msra.mxu0 %v607
      %853 = vmatprep.subr.mxu0 0.0
      %854 = vmatpush1.msra.mxu0 %v608
      %855 = vmatprep.subr.mxu0 0.0
      %856 = vmatpush1.msra.mxu0 %v609
      %857 = vmatprep.subr.mxu0 0.0
      %858 = vmatpush1.msra.mxu0 %v610
      %859 = vmatprep.subr.mxu0 0.0
      %860 = vmatpush1.msra.mxu0 %v611
      %861 = vmatprep.subr.mxu0 0.0
      %862 = vmatpush1.msra.mxu0 %v612
      %863 = vmatprep.subr.mxu0 0.0
      %864 = vmatpush1.msra.mxu0 %v613
      %865 = vmatprep.subr.mxu0 0.0
      %866 = vmatpush1.msra.mxu0 %v614
      %867 = vmatprep.subr.mxu0 0.0
      %868 = vmatpush1.msra.mxu0 %v615
      %869 = vmatprep.subr.mxu0 0.0
      %870 = vmatpush1.msra.mxu0 %v616
      %871 = vmatprep.subr.mxu0 0.0
      %872 = vmatpush1.msra.mxu0 %v617
      %873 = vmatprep.subr.mxu0 0.0
      %874 = vmatpush1.msra.mxu0 %v618
      %875 = vmatprep.subr.mxu0 0.0
      %876 = vmatpush1.msra.mxu0 %v619
      %877 = vmatprep.subr.mxu0 0.0
      %878 = vmatpush1.msra.mxu0 %v620
      %879 = vmatprep.subr.mxu0 0.0
      %880 = vmatpush1.msra.mxu0 %v621
      %881 = vmatprep.subr.mxu0 0.0
      %882 = vmatpush1.msra.mxu0 %v622
      %883 = vmatprep.subr.mxu0 0.0
      %884 = vmatpush1.msra.mxu0 %v623
      %885 = vmatprep.subr.mxu0 0.0
      %886 = vmatpush1.msra.mxu0 %v624
      %887 = vmatprep.mubr.f32.mxu0 %v516
      %888 = vmatmul.mubr.f32.gmra.mrb[0].mxu0 %v515
      %v889 = vpop.f32.mrb[0].mxu0
      %v890 = vadd.f32 %v815, %v889
      %v891 = vpop.f32.mrb[0].mxu0
      %892 = vmatprep.mubr.f32.mxu0 %v525
      %893 = vmatmul.mubr.f32.gmra.mrb[0].mxu0 %v524
      %v894 = vpop.f32.mrb[0].mxu0
      %v895 = vadd.f32 %v820, %v894
      %v896 = vpop.f32.mrb[0].mxu0
      %897 = vdwg.mxu0
      %898 = vmatprep.subr.mxu0 0.0
      %899 = vmatpush1.msra.mxu0 %v625
      %900 = vmatprep.subr.mxu0 0.0
      %901 = vmatpush1.msra.mxu0 %v626
      %902 = vmatprep.subr.mxu0 0.0
      %903 = vmatpush1.msra.mxu0 %v627
      %904 = vmatprep.subr.mxu0 0.0
      %905 = vmatpush1.msra.mxu0 %v628
      %906 = vmatprep.subr.mxu0 0.0
      %907 = vmatpush1.msra.mxu0 %v629
      %908 = vmatprep.subr.mxu0 0.0
      %909 = vmatpush1.msra.mxu0 %v630
      %910 = vmatprep.subr.mxu0 0.0
      %911 = vmatpush1.msra.mxu0 %v631
      %912 = vmatprep.subr.mxu0 0.0
      %913 = vmatpush1.msra.mxu0 %v632
      %914 = vmatprep.subr.mxu0 0.0
      %915 = vmatpush1.msra.mxu0 %v633
      %916 = vmatprep.subr.mxu0 0.0
      %917 = vmatpush1.msra.mxu0 %v634
      %918 = vmatprep.subr.mxu0 0.0
      %919 = vmatpush1.msra.mxu0 %v635
      %920 = vmatprep.subr.mxu0 0.0
      %921 = vmatpush1.msra.mxu0 %v636
      %922 = vmatprep.subr.mxu0 0.0
      %923 = vmatpush1.msra.mxu0 %v637
      %924 = vmatprep.subr.mxu0 0.0
      %925 = vmatpush1.msra.mxu0 %v638
      %926 = vmatprep.subr.mxu0 0.0
      %927 = vmatpush1.msra.mxu0 %v639
      %928 = vmatprep.subr.mxu0 0.0
      %929 = vmatpush1.msra.mxu0 %v640
      %930 = vmatprep.subr.mxu0 0.0
      %931 = vmatpush1.msra.mxu0 %v641
      %932 = vmatprep.subr.mxu0 0.0
      %933 = vmatpush1.msra.mxu0 %v642
      %934 = vmatprep.subr.mxu0 0.0
      %935 = vmatpush1.msra.mxu0 %v643
      %936 = vmatprep.subr.mxu0 0.0
      %937 = vmatpush1.msra.mxu0 %v644
      %938 = vmatprep.subr.mxu0 0.0
      %939 = vmatpush1.msra.mxu0 %v645
      %940 = vmatprep.subr.mxu0 0.0
      %941 = vmatpush1.msra.mxu0 %v646
      %942 = vmatprep.subr.mxu0 0.0
      %943 = vmatpush1.msra.mxu0 %v647
      %944 = vmatprep.subr.mxu0 0.0
      %945 = vmatpush1.msra.mxu0 %v648
      %946 = vmatprep.subr.mxu0 0.0
      %947 = vmatpush1.msra.mxu0 %v649
      %948 = vmatprep.subr.mxu0 0.0
      %949 = vmatpush1.msra.mxu0 %v650
      %950 = vmatprep.subr.mxu0 0.0
      %951 = vmatpush1.msra.mxu0 %v651
      %952 = vmatprep.subr.mxu0 0.0
      %953 = vmatpush1.msra.mxu0 %v652
      %954 = vmatprep.subr.mxu0 0.0
      %955 = vmatpush1.msra.mxu0 %v653
      %956 = vmatprep.subr.mxu0 0.0
      %957 = vmatpush1.msra.mxu0 %v654
      %958 = vmatprep.subr.mxu0 0.0
      %959 = vmatpush1.msra.mxu0 %v655
      %960 = vmatprep.subr.mxu0 0.0
      %961 = vmatpush1.msra.mxu0 %v656
      %962 = vmatprep.mubr.f32.mxu0 %v518
      %963 = vmatmul.mubr.f32.gmra.mrb[0].mxu0 %v517
      %v964 = vpop.f32.mrb[0].mxu0
      %v965 = vadd.f32 %v890, %v964
      %v966 = vpop.f32.mrb[0].mxu0
      %967 = vmatprep.mubr.f32.mxu0 %v527
      %968 = vmatmul.mubr.f32.gmra.mrb[0].mxu0 %v526
      %v969 = vpop.f32.mrb[0].mxu0
      %v970 = vadd.f32 %v895, %v969
      %v971 = vpop.f32.mrb[0].mxu0
      %972 = vdwg.mxu0
      %973 = vmatprep.subr.mxu0 0.0
      %974 = vmatpush1.msra.mxu0 %v657
      %975 = vmatprep.subr.mxu0 0.0
      %976 = vmatpush1.msra.mxu0 %v658
      %977 = vmatprep.subr.mxu0 0.0
      %978 = vmatpush1.msra.mxu0 %v659
      %979 = vmatprep.subr.mxu0 0.0
      %980 = vmatpush1.msra.mxu0 %v660
      %981 = vmatprep.subr.mxu0 0.0
      %982 = vmatpush1.msra.mxu0 %v661
      %983 = vmatprep.subr.mxu0 0.0
      %984 = vmatpush1.msra.mxu0 %v662
      %985 = vmatprep.subr.mxu0 0.0
      %986 = vmatpush1.msra.mxu0 %v663
      %987 = vmatprep.subr.mxu0 0.0
      %988 = vmatpush1.msra.mxu0 %v664
      %989 = vmatprep.subr.mxu0 0.0
      %990 = vmatpush1.msra.mxu0 %v665
      %991 = vmatprep.subr.mxu0 0.0
      %992 = vmatpush1.msra.mxu0 %v666
      %993 = vmatprep.subr.mxu0 0.0
      %994 = vmatpush1.msra.mxu0 %v667
      %995 = vmatprep.subr.mxu0 0.0
      %996 = vmatpush1.msra.mxu0 %v668
      %997 = vmatprep.subr.mxu0 0.0
      %998 = vmatpush1.msra.mxu0 %v669
      %999 = vmatprep.subr.mxu0 0.0
      %1000 = vmatpush1.msra.mxu0 %v670
      %1001 = vmatprep.subr.mxu0 0.0
      %1002 = vmatpush1.msra.mxu0 %v671
      %1003 = vmatprep.subr.mxu0 0.0
      %1004 = vmatpush1.msra.mxu0 %v672
      %1005 = vmatprep.subr.mxu0 0.0
      %1006 = vmatpush1.msra.mxu0 0.0
      %1007 = vmatprep.subr.mxu0 0.0
      %1008 = vmatpush1.msra.mxu0 0.0
      %1009 = vmatprep.subr.mxu0 0.0
      %1010 = vmatpush1.msra.mxu0 0.0
      %1011 = vmatprep.subr.mxu0 0.0
      %1012 = vmatpush1.msra.mxu0 0.0
      %1013 = vmatprep.subr.mxu0 0.0
      %1014 = vmatpush1.msra.mxu0 0.0
      %1015 = vmatprep.subr.mxu0 0.0
      %1016 = vmatpush1.msra.mxu0 0.0
      %1017 = vmatprep.subr.mxu0 0.0
      %1018 = vmatpush1.msra.mxu0 0.0
      %1019 = vmatprep.subr.mxu0 0.0
      %1020 = vmatpush1.msra.mxu0 0.0
      %1021 = vmatprep.subr.mxu0 0.0
      %1022 = vmatpush1.msra.mxu0 0.0
      %1023 = vmatprep.subr.mxu0 0.0
      %1024 = vmatpush1.msra.mxu0 0.0
      %1025 = vmatprep.subr.mxu0 0.0
      %1026 = vmatpush1.msra.mxu0 0.0
      %1027 = vmatprep.subr.mxu0 0.0
      %1028 = vmatpush1.msra.mxu0 0.0
      %1029 = vmatprep.subr.mxu0 0.0
      %1030 = vmatpush1.msra.mxu0 0.0
      %1031 = vmatprep.subr.mxu0 0.0
      %1032 = vmatpush1.msra.mxu0 0.0
      %1033 = vmatprep.subr.mxu0 0.0
      %1034 = vmatpush1.msra.mxu0 0.0
      %1035 = vmatprep.subr.mxu0 0.0
      %1036 = vmatpush1.msra.mxu0 0.0
      %1037 = vmatprep.mubr.f32.mxu0 0.0
      %1038 = vmatmul.mubr.f32.gmra.mrb[0].mxu0 %v519
      %v1039 = vpop.f32.mrb[0].mxu0
      %v1040 = vadd.f32 %v965, %v1039
      %v1041 = vpop.f32.mrb[0].mxu0
      %1042 = vmatprep.mubr.f32.mxu0 0.0
      %1043 = vmatmul.mubr.f32.gmra.mrb[0].mxu0 %v528
      %v1044 = vpop.f32.mrb[0].mxu0
      %v1045 = vadd.f32 %v970, %v1044
      %v1046 = vpop.f32.mrb[0].mxu0
      %1047 = vdwg.mxu0
      %1048 = vst [vmem:[%s170] sm:$0xff] %v1040
      %1049 = vst [vmem:[%s170 + $0x8] sm:$0xff] %v1045
      %p1050 = scmp.lt.s32.totalorder %s14, 3
      %s1051 = scalar_select %p1050, %s14, 3
      %s1052 = smul.addr %s1051, 2
      %s1053 = smul.addr %s1052, 8
      %s1054 = scalar_lea.vmem %s3, %s1053
      // Predicated region
      $region33: #{stn_encoder_forward.1} parent=31 // pred_check
        %p1055 = pneg %p100
      $region34: #{stn_encoder_forward.1} parent=31 // pred_check_branch
        %1057 = sbr.rel (%p1055) target = $region36
      $region35: #{stn_encoder_forward.1} parent=31 // pred_region
        _
      $region36: #{stn_encoder_forward.1} parent=31 // pred_fallthru
        _
    $region32: #{stn_encoder_forward.1} parent=5 // pred_fallthru
      _
    %p1058 = scmp.le.s32.totalorder 2, %s9
    // Predicated region
    $region37: #{stn_encoder_forward.1} parent=5 // pred_check
      %p1059 = pneg %p1058
    $region38: #{stn_encoder_forward.1} parent=5 // pred_check_branch
      %1061 = sbr.rel (%p1059) target = $region40
    $region39: #{stn_encoder_forward.1} parent=5 // pred_region
      %s1062 = ssub.s32 %s9, 2
      // Predicated region
      $region41: #{stn_encoder_forward.1} parent=39 // pred_check
        %p1063 = pneg %p106
      $region42: #{stn_encoder_forward.1} parent=39 // pred_check_branch
        %1065 = sbr.rel (%p1063) target = $region44
      $region43: #{stn_encoder_forward.1} parent=39 // pred_region
        %p1066 = scmp.lt.s32.totalorder %s15, 3
        %s1067 = scalar_select %p1066, %s15, 3
        %s1068 = smul.addr %s1067, 2
        %s1069 = smul.addr %s1068, 8
        %s1070 = scalar_lea.vmem %s3, %s1069
      $region44: #{stn_encoder_forward.1} parent=39 // pred_fallthru
        _
    $region40: #{stn_encoder_forward.1} parent=5 // pred_fallthru
      _
  $region6: #{stn_encoder_forward.1} parent=0 // loop_footer
    %s13 = sadd.s32 1, %s9
  $region7: #{stn_encoder_forward.1} parent=0 // loop_footer_branch
    %8 = sbr.rel target = $region3
  $region8: #{stn_encoder_forward.1} parent=0 // loop_exit
    _

</llo_original>
